<compile_context>
chip_gen: v7x
topology: tpu7x:2x2x1
jax: 0.10.0
libtpu: 0.0.40
codegen_flags: <defaults>
</compile_context>

<pallas_src>
import functools

import jax
import jax.numpy as jnp
from jax.experimental import pallas as pl
from jax.experimental.pallas import tpu as pltpu


# ---------------------------------------------------------------------------
# Fused kernel: input projection + GRU recurrence + MLP head, all in VMEM.
# ---------------------------------------------------------------------------
def _momentum_fused_kernel(x_ref, wih_t_ref, bi_ref, whh_t_ref, bhn_ref,
                           w1t_ref, b1_ref, w2t_ref, b2_ref,
                           out_ref, gi_ref, hs_ref, *, seq_len, batch, hidden):
    T, B, H = seq_len, batch, hidden

    # ---- 1) packed, time-independent input projection (one MXU push) ------
    # gi[:, :2H] carries folded (b_ih + b_hh) for r/z; gi[:, 2H:] carries only
    # b_ih_n — b_hh_n must stay inside the r * (...) term per GRU semantics.
    gi_ref[...] = (
        jnp.dot(x_ref[...], wih_t_ref[...], preferred_element_type=jnp.float32)
        + bi_ref[...])                                             # (T*B, 3H)

    whh_t = whh_t_ref[...]            # (H, 3H), pre-transposed, gate-packed
    bhn = bhn_ref[...]                # (1, H)

    # ---- 2) GRU recurrence: one packed (B,H)@(H,3H) matmul per timestep ---
    h = jnp.zeros((B, H), jnp.float32)
    for t in range(T):                # static full unroll; T is small & static
        lo = t * B
        gi_t = gi_ref[lo:lo + B, :]                                   # (B, 3H)
        gh = jnp.dot(h, whh_t, preferred_element_type=jnp.float32)    # (B, 3H)
        r = jax.nn.sigmoid(gi_t[:, :H] + gh[:, :H])
        z = jax.nn.sigmoid(gi_t[:, H:2 * H] + gh[:, H:2 * H])
        n = jnp.tanh(gi_t[:, 2 * H:] + r * (gh[:, 2 * H:] + bhn))
        h = (1.0 - z) * n + z * h
        hs_ref[lo:lo + B, :] = h

    # ---- 3) MLP head on the full (T*B, H) slab (batched, no recurrence) ---
    hid = jnp.maximum(
        jnp.dot(hs_ref[...], w1t_ref[...], preferred_element_type=jnp.float32)
        + b1_ref[...], 0.0)
    out_ref[...] = (
        jnp.dot(hid, w2t_ref[...], preferred_element_type=jnp.float32)
        + b2_ref[...]).astype(out_ref.dtype)


# ---------------------------------------------------------------------------
# One-time parameter preparation (hoisted out of the per-forward hot path)
# ---------------------------------------------------------------------------
def prepare_params(params):
    """Pack/transposed weights + folded biases; run once, outside jit."""
    w_ih, w_hh, b_ih, b_hh, w1, b1, w2, b2 = params
    H = w_hh.shape[1]
    # Fold b_hh into b_ih for the r/z gates; keep b_hh_n separate.
    bi = b_ih + jnp.concatenate(
        [b_hh[:, :2 * H], jnp.zeros((1, H), b_hh.dtype)], axis=1)   # (1, 3H)
    return (w_ih.T,            # (I, 3H)  gate columns in PyTorch order r|z|n
            bi,                # (1, 3H)
            w_hh.T,            # (H, 3H)
            b_hh[:, 2 * H:],   # (1, H)   b_hh_n
            w1.T, b1,          # (H, H), (1, H)
            w2.T, b2)          # (H, O), (1, O)


# ---------------------------------------------------------------------------
# Forward wrapper: exactly one pallas_call
# ---------------------------------------------------------------------------
def momentum_model_forward(x, prepped):
    """x: (T, B, I) float32. Returns (T, B, O) float32."""
    T, B, I = x.shape
    wih_t, bi, whh_t, bhn, w1t, b1, w2t, b2 = prepped
    H = whh_t.shape[0]
    O = w2t.shape[1]

    full = lambda shape: pl.BlockSpec(shape, lambda i: tuple(0 for _ in shape))

    kernel = functools.partial(
        _momentum_fused_kernel, seq_len=T, batch=B, hidden=H)

    out2d = pl.pallas_call(
        kernel,
        out_shape=jax.ShapeDtypeStruct((T * B, O), jnp.float32),
        grid_spec=pltpu.PrefetchScalarGridSpec(
            num_scalar_prefetch=0,
            grid=(1,),
            in_specs=[full((T * B, I)),
                      full((I, 3 * H)), full((1, 3 * H)),
                      full((H, 3 * H)), full((1, H)),
                      full((H, H)), full((1, H)),
                      full((H, O)), full((1, O))],
            out_specs=full((T * B, O)),
            scratch_shapes=[pltpu.VMEM((T * B, 3 * H), jnp.float32),  # gate slab
                            pltpu.VMEM((T * B, H), jnp.float32)],     # hidden slab
        ),
        compiler_params=pltpu.CompilerParams(
            dimension_semantics=("arbitrary",)),
    )(x.reshape(T * B, I), wih_t, bi, whh_t, bhn, w1t, b1, w2t, b2)

    return out2d.reshape(T, B, O)


# ---------------------------------------------------------------------------
# Pure-JAX reference (mirrors PyTorch GRU + Sequential semantics)
# ---------------------------------------------------------------------------
def momentum_model_reference(x, params):
    w_ih, w_hh, b_ih, b_hh, w1, b1, w2, b2 = params
    H = w_hh.shape[1]

    def step(h, x_t):
        gi = x_t @ w_ih.T + b_ih[0]
        gh = h @ w_hh.T + b_hh[0]
        r = jax.nn.sigmoid(gi[:, :H] + gh[:, :H])
        z = jax.nn.sigmoid(gi[:, H:2 * H] + gh[:, H:2 * H])
        n = jnp.tanh(gi[:, 2 * H:] + r * gh[:, 2 * H:])
        h_new = (1.0 - z) * n + z * h
        return h_new, h_new

    h0 = jnp.zeros((x.shape[1], H), jnp.float32)
    _, hs = jax.lax.scan(step, h0, x)                 # (T, B, H)
    hid = jnp.maximum(hs @ w1.T + b1[0], 0.0)
    return hid @ w2.T + b2[0]


def init_params(key, input_size, hidden_size, output_size):
    """Deterministic uniform(-k, k) init, matching PyTorch shape conventions."""
    ks = jax.random.split(key, 8)
    kg = 1.0 / jnp.sqrt(hidden_size)
    u = lambda k, shape, scale: jax.random.uniform(k, shape, jnp.float32, -scale, scale)
    w_ih = u(ks[0], (3 * hidden_size, input_size), kg)
    w_hh = u(ks[1], (3 * hidden_size, hidden_size), kg)
    b_ih = u(ks[2], (1, 3 * hidden_size), kg)
    b_hh = u(ks[3], (1, 3 * hidden_size), kg)
    w1 = u(ks[4], (hidden_size, hidden_size), kg)
    b1 = u(ks[5], (1, hidden_size), kg)
    w2 = u(ks[6], (output_size, hidden_size), kg)
    b2 = u(ks[7], (1, output_size), kg)
    return (w_ih, w_hh, b_ih, b_hh, w1, b1, w2, b2)


if __name__ == "__main__":
    T, B, I, H, O = 8, 2, 8, 32, 1

    key = jax.random.PRNGKey(0)
    kx, kp = jax.random.split(key)
    x = jax.random.normal(kx, (T, B, I), jnp.float32)
    params = init_params(kp, I, H, O)

    prepped = prepare_params(params)          # one-time packing, off hot path
    fwd = jax.jit(momentum_model_forward)
    out = jax.block_until_ready(fwd(x, prepped))

    ref = momentum_model_reference(x, params)
    assert out.shape == (T, B, O)
    max_err = jnp.max(jnp.abs(out - ref))
    assert jnp.allclose(out, ref, atol=3e-5, rtol=3e-5), f"max abs err {max_err}"
    print("KERNEL_OK")
</pallas_src>

<mosaic_0001>
module attributes {stable_mosaic.version = 11 : i64} {
  func.func @_momentum_fused_kernel(%arg0: i32, %arg1: memref<16x8xf32, #tpu.memory_space<vmem>>, %arg2: memref<8x96xf32, #tpu.memory_space<vmem>>, %arg3: memref<1x96xf32, #tpu.memory_space<vmem>>, %arg4: memref<32x96xf32, #tpu.memory_space<vmem>>, %arg5: memref<1x32xf32, #tpu.memory_space<vmem>>, %arg6: memref<32x32xf32, #tpu.memory_space<vmem>>, %arg7: memref<1x32xf32, #tpu.memory_space<vmem>>, %arg8: memref<32x1xf32, #tpu.memory_space<vmem>>, %arg9: memref<1x1xf32, #tpu.memory_space<vmem>>, %arg10: memref<16x1xf32, #tpu.memory_space<vmem>>, %arg11: memref<16x96xf32, #tpu.memory_space<vmem>>, %arg12: memref<16x32xf32, #tpu.memory_space<vmem>>) attributes {dimension_semantics = [#tpu.dimension_semantics<arbitrary>], iteration_bounds = array<i64: 1>, scalar_prefetch = 0 : i64, scratch_operands = 2 : i64, tpu.core_type = #tpu.core_type<tc>, window_params = [{pipeline_mode = #tpu.pipeline_mode<synchronous>, transform_indices = @transform_0, window_bounds = array<i64: 16, 8>}, {pipeline_mode = #tpu.pipeline_mode<synchronous>, transform_indices = @transform_1, window_bounds = array<i64: 8, 96>}, {pipeline_mode = #tpu.pipeline_mode<synchronous>, transform_indices = @transform_2, window_bounds = array<i64: 1, 96>}, {pipeline_mode = #tpu.pipeline_mode<synchronous>, transform_indices = @transform_3, window_bounds = array<i64: 32, 96>}, {pipeline_mode = #tpu.pipeline_mode<synchronous>, transform_indices = @transform_4, window_bounds = array<i64: 1, 32>}, {pipeline_mode = #tpu.pipeline_mode<synchronous>, transform_indices = @transform_5, window_bounds = array<i64: 32, 32>}, {pipeline_mode = #tpu.pipeline_mode<synchronous>, transform_indices = @transform_6, window_bounds = array<i64: 1, 32>}, {pipeline_mode = #tpu.pipeline_mode<synchronous>, transform_indices = @transform_7, window_bounds = array<i64: 32, 1>}, {pipeline_mode = #tpu.pipeline_mode<synchronous>, transform_indices = @transform_8, window_bounds = array<i64: 1, 1>}, {pipeline_mode = #tpu.pipeline_mode<synchronous>, transform_indices = @transform_9, window_bounds = array<i64: 16, 1>}]} {
    %c0 = arith.constant 0 : index
    %c0_0 = arith.constant 0 : index
    %0 = vector.load %arg1[%c0, %c0_0] : memref<16x8xf32, #tpu.memory_space<vmem>>, vector<16x8xf32>
    %c0_1 = arith.constant 0 : index
    %c0_2 = arith.constant 0 : index
    %1 = vector.load %arg2[%c0_1, %c0_2] : memref<8x96xf32, #tpu.memory_space<vmem>>, vector<8x96xf32>
    %cst = arith.constant dense<0.000000e+00> : vector<16x96xf32>
    %2 = tpu.matmul %0, %1, %cst {dimension_numbers = #tpu.dot_dimension_numbers<[1], [0], [0], [1], [0, 0, 1, 1], [], []>} : vector<16x8xf32>, vector<8x96xf32>, vector<16x96xf32> -> vector<16x96xf32>
    %c0_3 = arith.constant 0 : index
    %c0_4 = arith.constant 0 : index
    %3 = vector.load %arg3[%c0_3, %c0_4] : memref<1x96xf32, #tpu.memory_space<vmem>>, vector<1x96xf32>
    %4 = vector.broadcast %3 : vector<1x96xf32> to vector<16x96xf32>
    %5 = arith.addf %2, %4 : vector<16x96xf32>
    %c0_5 = arith.constant 0 : index
    %c0_6 = arith.constant 0 : index
    %6 = vector.load %arg11[%c0_5, %c0_6] : memref<16x96xf32, #tpu.memory_space<vmem>>, vector<16x96xf32>
    tpu.vector_store %arg11[%c0_5, %c0_6], %5 {strides = array<i32>} : memref<16x96xf32, #tpu.memory_space<vmem>>, vector<16x96xf32>,
    %c0_7 = arith.constant 0 : index
    %c0_8 = arith.constant 0 : index
    %7 = vector.load %arg4[%c0_7, %c0_8] : memref<32x96xf32, #tpu.memory_space<vmem>>, vector<32x96xf32>
    %c0_9 = arith.constant 0 : index
    %c0_10 = arith.constant 0 : index
    %8 = vector.load %arg5[%c0_9, %c0_10] : memref<1x32xf32, #tpu.memory_space<vmem>>, vector<1x32xf32>
    %cst_11 = arith.constant 0.000000e+00 : f32
    %9 = vector.broadcast %cst_11 : f32 to vector<2x32xf32>
    %c0_12 = arith.constant 0 : index
    %c0_13 = arith.constant 0 : index
    %10 = vector.load %arg11[%c0_12, %c0_13] : memref<16x96xf32, #tpu.memory_space<vmem>>, vector<2x96xf32>
    %cst_14 = arith.constant dense<0.000000e+00> : vector<2x96xf32>
    %11 = tpu.matmul %9, %7, %cst_14 {dimension_numbers = #tpu.dot_dimension_numbers<[1], [0], [0], [1], [0, 0, 1, 1], [], []>} : vector<2x32xf32>, vector<32x96xf32>, vector<2x96xf32> -> vector<2x96xf32>
    %12 = vector.extract_strided_slice %10 {offsets = [0, 0], sizes = [2, 32], strides = [1, 1]} : vector<2x96xf32> to vector<2x32xf32>
    %13 = vector.extract_strided_slice %11 {offsets = [0, 0], sizes = [2, 32], strides = [1, 1]} : vector<2x96xf32> to vector<2x32xf32>
    %14 = arith.addf %12, %13 : vector<2x32xf32>
    %15 = arith.negf %14 : vector<2x32xf32>
    %16 = math.exp %15 : vector<2x32xf32>
    %cst_15 = arith.constant 1.000000e+00 : f32
    %17 = vector.broadcast %cst_15 : f32 to vector<2x32xf32>
    %18 = arith.addf %17, %16 : vector<2x32xf32>
    %19 = arith.divf %17, %18 : vector<2x32xf32>
    %20 = vector.extract_strided_slice %10 {offsets = [0, 32], sizes = [2, 32], strides = [1, 1]} : vector<2x96xf32> to vector<2x32xf32>
    %21 = vector.extract_strided_slice %11 {offsets = [0, 32], sizes = [2, 32], strides = [1, 1]} : vector<2x96xf32> to vector<2x32xf32>
    %22 = arith.addf %20, %21 : vector<2x32xf32>
    %23 = arith.negf %22 : vector<2x32xf32>
    %24 = math.exp %23 : vector<2x32xf32>
    %cst_16 = arith.constant 1.000000e+00 : f32
    %25 = vector.broadcast %cst_16 : f32 to vector<2x32xf32>
    %26 = arith.addf %25, %24 : vector<2x32xf32>
    %27 = arith.divf %25, %26 : vector<2x32xf32>
    %28 = vector.extract_strided_slice %10 {offsets = [0, 64], sizes = [2, 32], strides = [1, 1]} : vector<2x96xf32> to vector<2x32xf32>
    %29 = vector.extract_strided_slice %11 {offsets = [0, 64], sizes = [2, 32], strides = [1, 1]} : vector<2x96xf32> to vector<2x32xf32>
    %30 = vector.broadcast %8 : vector<1x32xf32> to vector<2x32xf32>
    %31 = arith.addf %29, %30 : vector<2x32xf32>
    %32 = arith.mulf %19, %31 : vector<2x32xf32>
    %33 = arith.addf %28, %32 : vector<2x32xf32>
    %34 = math.tanh %33 : vector<2x32xf32>
    %cst_17 = arith.constant 1.000000e+00 : f32
    %35 = vector.broadcast %cst_17 : f32 to vector<2x32xf32>
    %36 = arith.subf %35, %27 : vector<2x32xf32>
    %37 = arith.mulf %36, %34 : vector<2x32xf32>
    %38 = arith.mulf %27, %9 : vector<2x32xf32>
    %39 = arith.addf %37, %38 : vector<2x32xf32>
    %c0_18 = arith.constant 0 : index
    %c0_19 = arith.constant 0 : index
    %40 = vector.load %arg12[%c0_18, %c0_19] : memref<16x32xf32, #tpu.memory_space<vmem>>, vector<2x32xf32>
    tpu.vector_store %arg12[%c0_18, %c0_19], %39 {strides = array<i32>} : memref<16x32xf32, #tpu.memory_space<vmem>>, vector<2x32xf32>,
    %c2 = arith.constant 2 : index
    %c0_20 = arith.constant 0 : index
    %41 = vector.load %arg11[%c2, %c0_20] : memref<16x96xf32, #tpu.memory_space<vmem>>, vector<2x96xf32>
    %cst_21 = arith.constant dense<0.000000e+00> : vector<2x96xf32>
    %42 = tpu.matmul %39, %7, %cst_21 {dimension_numbers = #tpu.dot_dimension_numbers<[1], [0], [0], [1], [0, 0, 1, 1], [], []>} : vector<2x32xf32>, vector<32x96xf32>, vector<2x96xf32> -> vector<2x96xf32>
    %43 = vector.extract_strided_slice %41 {offsets = [0, 0], sizes = [2, 32], strides = [1, 1]} : vector<2x96xf32> to vector<2x32xf32>
    %44 = vector.extract_strided_slice %42 {offsets = [0, 0], sizes = [2, 32], strides = [1, 1]} : vector<2x96xf32> to vector<2x32xf32>
    %45 = arith.addf %43, %44 : vector<2x32xf32>
    %46 = arith.negf %45 : vector<2x32xf32>
    %47 = math.exp %46 : vector<2x32xf32>
    %cst_22 = arith.constant 1.000000e+00 : f32
    %48 = vector.broadcast %cst_22 : f32 to vector<2x32xf32>
    %49 = arith.addf %48, %47 : vector<2x32xf32>
    %50 = arith.divf %48, %49 : vector<2x32xf32>
    %51 = vector.extract_strided_slice %41 {offsets = [0, 32], sizes = [2, 32], strides = [1, 1]} : vector<2x96xf32> to vector<2x32xf32>
    %52 = vector.extract_strided_slice %42 {offsets = [0, 32], sizes = [2, 32], strides = [1, 1]} : vector<2x96xf32> to vector<2x32xf32>
    %53 = arith.addf %51, %52 : vector<2x32xf32>
    %54 = arith.negf %53 : vector<2x32xf32>
    %55 = math.exp %54 : vector<2x32xf32>
    %cst_23 = arith.constant 1.000000e+00 : f32
    %56 = vector.broadcast %cst_23 : f32 to vector<2x32xf32>
    %57 = arith.addf %56, %55 : vector<2x32xf32>
    %58 = arith.divf %56, %57 : vector<2x32xf32>
    %59 = vector.extract_strided_slice %41 {offsets = [0, 64], sizes = [2, 32], strides = [1, 1]} : vector<2x96xf32> to vector<2x32xf32>
    %60 = vector.extract_strided_slice %42 {offsets = [0, 64], sizes = [2, 32], strides = [1, 1]} : vector<2x96xf32> to vector<2x32xf32>
    %61 = vector.broadcast %8 : vector<1x32xf32> to vector<2x32xf32>
    %62 = arith.addf %60, %61 : vector<2x32xf32>
    %63 = arith.mulf %50, %62 : vector<2x32xf32>
    %64 = arith.addf %59, %63 : vector<2x32xf32>
    %65 = math.tanh %64 : vector<2x32xf32>
    %cst_24 = arith.constant 1.000000e+00 : f32
    %66 = vector.broadcast %cst_24 : f32 to vector<2x32xf32>
    %67 = arith.subf %66, %58 : vector<2x32xf32>
    %68 = arith.mulf %67, %65 : vector<2x32xf32>
    %69 = arith.mulf %58, %39 : vector<2x32xf32>
    %70 = arith.addf %68, %69 : vector<2x32xf32>
    %c2_25 = arith.constant 2 : index
    %c0_26 = arith.constant 0 : index
    %71 = vector.load %arg12[%c2_25, %c0_26] : memref<16x32xf32, #tpu.memory_space<vmem>>, vector<2x32xf32>
    tpu.vector_store %arg12[%c2_25, %c0_26], %70 {strides = array<i32>} : memref<16x32xf32, #tpu.memory_space<vmem>>, vector<2x32xf32>,
    %c4 = arith.constant 4 : index
    %c0_27 = arith.constant 0 : index
    %72 = vector.load %arg11[%c4, %c0_27] : memref<16x96xf32, #tpu.memory_space<vmem>>, vector<2x96xf32>
    %cst_28 = arith.constant dense<0.000000e+00> : vector<2x96xf32>
    %73 = tpu.matmul %70, %7, %cst_28 {dimension_numbers = #tpu.dot_dimension_numbers<[1], [0], [0], [1], [0, 0, 1, 1], [], []>} : vector<2x32xf32>, vector<32x96xf32>, vector<2x96xf32> -> vector<2x96xf32>
    %74 = vector.extract_strided_slice %72 {offsets = [0, 0], sizes = [2, 32], strides = [1, 1]} : vector<2x96xf32> to vector<2x32xf32>
    %75 = vector.extract_strided_slice %73 {offsets = [0, 0], sizes = [2, 32], strides = [1, 1]} : vector<2x96xf32> to vector<2x32xf32>
    %76 = arith.addf %74, %75 : vector<2x32xf32>
    %77 = arith.negf %76 : vector<2x32xf32>
    %78 = math.exp %77 : vector<2x32xf32>
    %cst_29 = arith.constant 1.000000e+00 : f32
    %79 = vector.broadcast %cst_29 : f32 to vector<2x32xf32>
    %80 = arith.addf %79, %78 : vector<2x32xf32>
    %81 = arith.divf %79, %80 : vector<2x32xf32>
    %82 = vector.extract_strided_slice %72 {offsets = [0, 32], sizes = [2, 32], strides = [1, 1]} : vector<2x96xf32> to vector<2x32xf32>
    %83 = vector.extract_strided_slice %73 {offsets = [0, 32], sizes = [2, 32], strides = [1, 1]} : vector<2x96xf32> to vector<2x32xf32>
    %84 = arith.addf %82, %83 : vector<2x32xf32>
    %85 = arith.negf %84 : vector<2x32xf32>
    %86 = math.exp %85 : vector<2x32xf32>
    %cst_30 = arith.constant 1.000000e+00 : f32
    %87 = vector.broadcast %cst_30 : f32 to vector<2x32xf32>
    %88 = arith.addf %87, %86 : vector<2x32xf32>
    %89 = arith.divf %87, %88 : vector<2x32xf32>
    %90 = vector.extract_strided_slice %72 {offsets = [0, 64], sizes = [2, 32], strides = [1, 1]} : vector<2x96xf32> to vector<2x32xf32>
    %91 = vector.extract_strided_slice %73 {offsets = [0, 64], sizes = [2, 32], strides = [1, 1]} : vector<2x96xf32> to vector<2x32xf32>
    %92 = vector.broadcast %8 : vector<1x32xf32> to vector<2x32xf32>
    %93 = arith.addf %91, %92 : vector<2x32xf32>
    %94 = arith.mulf %81, %93 : vector<2x32xf32>
    %95 = arith.addf %90, %94 : vector<2x32xf32>
    %96 = math.tanh %95 : vector<2x32xf32>
    %cst_31 = arith.constant 1.000000e+00 : f32
    %97 = vector.broadcast %cst_31 : f32 to vector<2x32xf32>
    %98 = arith.subf %97, %89 : vector<2x32xf32>
    %99 = arith.mulf %98, %96 : vector<2x32xf32>
    %100 = arith.mulf %89, %70 : vector<2x32xf32>
    %101 = arith.addf %99, %100 : vector<2x32xf32>
    %c4_32 = arith.constant 4 : index
    %c0_33 = arith.constant 0 : index
    %102 = vector.load %arg12[%c4_32, %c0_33] : memref<16x32xf32, #tpu.memory_space<vmem>>, vector<2x32xf32>
    tpu.vector_store %arg12[%c4_32, %c0_33], %101 {strides = array<i32>} : memref<16x32xf32, #tpu.memory_space<vmem>>, vector<2x32xf32>,
    %c6 = arith.constant 6 : index
    %c0_34 = arith.constant 0 : index
    %103 = vector.load %arg11[%c6, %c0_34] : memref<16x96xf32, #tpu.memory_space<vmem>>, vector<2x96xf32>
    %cst_35 = arith.constant dense<0.000000e+00> : vector<2x96xf32>
    %104 = tpu.matmul %101, %7, %cst_35 {dimension_numbers = #tpu.dot_dimension_numbers<[1], [0], [0], [1], [0, 0, 1, 1], [], []>} : vector<2x32xf32>, vector<32x96xf32>, vector<2x96xf32> -> vector<2x96xf32>
    %105 = vector.extract_strided_slice %103 {offsets = [0, 0], sizes = [2, 32], strides = [1, 1]} : vector<2x96xf32> to vector<2x32xf32>
    %106 = vector.extract_strided_slice %104 {offsets = [0, 0], sizes = [2, 32], strides = [1, 1]} : vector<2x96xf32> to vector<2x32xf32>
    %107 = arith.addf %105, %106 : vector<2x32xf32>
    %108 = arith.negf %107 : vector<2x32xf32>
    %109 = math.exp %108 : vector<2x32xf32>
    %cst_36 = arith.constant 1.000000e+00 : f32
    %110 = vector.broadcast %cst_36 : f32 to vector<2x32xf32>
    %111 = arith.addf %110, %109 : vector<2x32xf32>
    %112 = arith.divf %110, %111 : vector<2x32xf32>
    %113 = vector.extract_strided_slice %103 {offsets = [0, 32], sizes = [2, 32], strides = [1, 1]} : vector<2x96xf32> to vector<2x32xf32>
    %114 = vector.extract_strided_slice %104 {offsets = [0, 32], sizes = [2, 32], strides = [1, 1]} : vector<2x96xf32> to vector<2x32xf32>
    %115 = arith.addf %113, %114 : vector<2x32xf32>
    %116 = arith.negf %115 : vector<2x32xf32>
    %117 = math.exp %116 : vector<2x32xf32>
    %cst_37 = arith.constant 1.000000e+00 : f32
    %118 = vector.broadcast %cst_37 : f32 to vector<2x32xf32>
    %119 = arith.addf %118, %117 : vector<2x32xf32>
    %120 = arith.divf %118, %119 : vector<2x32xf32>
    %121 = vector.extract_strided_slice %103 {offsets = [0, 64], sizes = [2, 32], strides = [1, 1]} : vector<2x96xf32> to vector<2x32xf32>
    %122 = vector.extract_strided_slice %104 {offsets = [0, 64], sizes = [2, 32], strides = [1, 1]} : vector<2x96xf32> to vector<2x32xf32>
    %123 = vector.broadcast %8 : vector<1x32xf32> to vector<2x32xf32>
    %124 = arith.addf %122, %123 : vector<2x32xf32>
    %125 = arith.mulf %112, %124 : vector<2x32xf32>
    %126 = arith.addf %121, %125 : vector<2x32xf32>
    %127 = math.tanh %126 : vector<2x32xf32>
    %cst_38 = arith.constant 1.000000e+00 : f32
    %128 = vector.broadcast %cst_38 : f32 to vector<2x32xf32>
    %129 = arith.subf %128, %120 : vector<2x32xf32>
    %130 = arith.mulf %129, %127 : vector<2x32xf32>
    %131 = arith.mulf %120, %101 : vector<2x32xf32>
    %132 = arith.addf %130, %131 : vector<2x32xf32>
    %c6_39 = arith.constant 6 : index
    %c0_40 = arith.constant 0 : index
    %133 = vector.load %arg12[%c6_39, %c0_40] : memref<16x32xf32, #tpu.memory_space<vmem>>, vector<2x32xf32>
    tpu.vector_store %arg12[%c6_39, %c0_40], %132 {strides = array<i32>} : memref<16x32xf32, #tpu.memory_space<vmem>>, vector<2x32xf32>,
    %c8 = arith.constant 8 : index
    %c0_41 = arith.constant 0 : index
    %134 = vector.load %arg11[%c8, %c0_41] : memref<16x96xf32, #tpu.memory_space<vmem>>, vector<2x96xf32>
    %cst_42 = arith.constant dense<0.000000e+00> : vector<2x96xf32>
    %135 = tpu.matmul %132, %7, %cst_42 {dimension_numbers = #tpu.dot_dimension_numbers<[1], [0], [0], [1], [0, 0, 1, 1], [], []>} : vector<2x32xf32>, vector<32x96xf32>, vector<2x96xf32> -> vector<2x96xf32>
    %136 = vector.extract_strided_slice %134 {offsets = [0, 0], sizes = [2, 32], strides = [1, 1]} : vector<2x96xf32> to vector<2x32xf32>
    %137 = vector.extract_strided_slice %135 {offsets = [0, 0], sizes = [2, 32], strides = [1, 1]} : vector<2x96xf32> to vector<2x32xf32>
    %138 = arith.addf %136, %137 : vector<2x32xf32>
    %139 = arith.negf %138 : vector<2x32xf32>
    %140 = math.exp %139 : vector<2x32xf32>
    %cst_43 = arith.constant 1.000000e+00 : f32
    %141 = vector.broadcast %cst_43 : f32 to vector<2x32xf32>
    %142 = arith.addf %141, %140 : vector<2x32xf32>
    %143 = arith.divf %141, %142 : vector<2x32xf32>
    %144 = vector.extract_strided_slice %134 {offsets = [0, 32], sizes = [2, 32], strides = [1, 1]} : vector<2x96xf32> to vector<2x32xf32>
    %145 = vector.extract_strided_slice %135 {offsets = [0, 32], sizes = [2, 32], strides = [1, 1]} : vector<2x96xf32> to vector<2x32xf32>
    %146 = arith.addf %144, %145 : vector<2x32xf32>
    %147 = arith.negf %146 : vector<2x32xf32>
    %148 = math.exp %147 : vector<2x32xf32>
    %cst_44 = arith.constant 1.000000e+00 : f32
    %149 = vector.broadcast %cst_44 : f32 to vector<2x32xf32>
    %150 = arith.addf %149, %148 : vector<2x32xf32>
    %151 = arith.divf %149, %150 : vector<2x32xf32>
    %152 = vector.extract_strided_slice %134 {offsets = [0, 64], sizes = [2, 32], strides = [1, 1]} : vector<2x96xf32> to vector<2x32xf32>
    %153 = vector.extract_strided_slice %135 {offsets = [0, 64], sizes = [2, 32], strides = [1, 1]} : vector<2x96xf32> to vector<2x32xf32>
    %154 = vector.broadcast %8 : vector<1x32xf32> to vector<2x32xf32>
    %155 = arith.addf %153, %154 : vector<2x32xf32>
    %156 = arith.mulf %143, %155 : vector<2x32xf32>
    %157 = arith.addf %152, %156 : vector<2x32xf32>
    %158 = math.tanh %157 : vector<2x32xf32>
    %cst_45 = arith.constant 1.000000e+00 : f32
    %159 = vector.broadcast %cst_45 : f32 to vector<2x32xf32>
    %160 = arith.subf %159, %151 : vector<2x32xf32>
    %161 = arith.mulf %160, %158 : vector<2x32xf32>
    %162 = arith.mulf %151, %132 : vector<2x32xf32>
    %163 = arith.addf %161, %162 : vector<2x32xf32>
    %c8_46 = arith.constant 8 : index
    %c0_47 = arith.constant 0 : index
    %164 = vector.load %arg12[%c8_46, %c0_47] : memref<16x32xf32, #tpu.memory_space<vmem>>, vector<2x32xf32>
    tpu.vector_store %arg12[%c8_46, %c0_47], %163 {strides = array<i32>} : memref<16x32xf32, #tpu.memory_space<vmem>>, vector<2x32xf32>,
    %c10 = arith.constant 10 : index
    %c0_48 = arith.constant 0 : index
    %165 = vector.load %arg11[%c10, %c0_48] : memref<16x96xf32, #tpu.memory_space<vmem>>, vector<2x96xf32>
    %cst_49 = arith.constant dense<0.000000e+00> : vector<2x96xf32>
    %166 = tpu.matmul %163, %7, %cst_49 {dimension_numbers = #tpu.dot_dimension_numbers<[1], [0], [0], [1], [0, 0, 1, 1], [], []>} : vector<2x32xf32>, vector<32x96xf32>, vector<2x96xf32> -> vector<2x96xf32>
    %167 = vector.extract_strided_slice %165 {offsets = [0, 0], sizes = [2, 32], strides = [1, 1]} : vector<2x96xf32> to vector<2x32xf32>
    %168 = vector.extract_strided_slice %166 {offsets = [0, 0], sizes = [2, 32], strides = [1, 1]} : vector<2x96xf32> to vector<2x32xf32>
    %169 = arith.addf %167, %168 : vector<2x32xf32>
    %170 = arith.negf %169 : vector<2x32xf32>
    %171 = math.exp %170 : vector<2x32xf32>
    %cst_50 = arith.constant 1.000000e+00 : f32
    %172 = vector.broadcast %cst_50 : f32 to vector<2x32xf32>
    %173 = arith.addf %172, %171 : vector<2x32xf32>
    %174 = arith.divf %172, %173 : vector<2x32xf32>
    %175 = vector.extract_strided_slice %165 {offsets = [0, 32], sizes = [2, 32], strides = [1, 1]} : vector<2x96xf32> to vector<2x32xf32>
    %176 = vector.extract_strided_slice %166 {offsets = [0, 32], sizes = [2, 32], strides = [1, 1]} : vector<2x96xf32> to vector<2x32xf32>
    %177 = arith.addf %175, %176 : vector<2x32xf32>
    %178 = arith.negf %177 : vector<2x32xf32>
    %179 = math.exp %178 : vector<2x32xf32>
    %cst_51 = arith.constant 1.000000e+00 : f32
    %180 = vector.broadcast %cst_51 : f32 to vector<2x32xf32>
    %181 = arith.addf %180, %179 : vector<2x32xf32>
    %182 = arith.divf %180, %181 : vector<2x32xf32>
    %183 = vector.extract_strided_slice %165 {offsets = [0, 64], sizes = [2, 32], strides = [1, 1]} : vector<2x96xf32> to vector<2x32xf32>
    %184 = vector.extract_strided_slice %166 {offsets = [0, 64], sizes = [2, 32], strides = [1, 1]} : vector<2x96xf32> to vector<2x32xf32>
    %185 = vector.broadcast %8 : vector<1x32xf32> to vector<2x32xf32>
    %186 = arith.addf %184, %185 : vector<2x32xf32>
    %187 = arith.mulf %174, %186 : vector<2x32xf32>
    %188 = arith.addf %183, %187 : vector<2x32xf32>
    %189 = math.tanh %188 : vector<2x32xf32>
    %cst_52 = arith.constant 1.000000e+00 : f32
    %190 = vector.broadcast %cst_52 : f32 to vector<2x32xf32>
    %191 = arith.subf %190, %182 : vector<2x32xf32>
    %192 = arith.mulf %191, %189 : vector<2x32xf32>
    %193 = arith.mulf %182, %163 : vector<2x32xf32>
    %194 = arith.addf %192, %193 : vector<2x32xf32>
    %c10_53 = arith.constant 10 : index
    %c0_54 = arith.constant 0 : index
    %195 = vector.load %arg12[%c10_53, %c0_54] : memref<16x32xf32, #tpu.memory_space<vmem>>, vector<2x32xf32>
    tpu.vector_store %arg12[%c10_53, %c0_54], %194 {strides = array<i32>} : memref<16x32xf32, #tpu.memory_space<vmem>>, vector<2x32xf32>,
    %c12 = arith.constant 12 : index
    %c0_55 = arith.constant 0 : index
    %196 = vector.load %arg11[%c12, %c0_55] : memref<16x96xf32, #tpu.memory_space<vmem>>, vector<2x96xf32>
    %cst_56 = arith.constant dense<0.000000e+00> : vector<2x96xf32>
    %197 = tpu.matmul %194, %7, %cst_56 {dimension_numbers = #tpu.dot_dimension_numbers<[1], [0], [0], [1], [0, 0, 1, 1], [], []>} : vector<2x32xf32>, vector<32x96xf32>, vector<2x96xf32> -> vector<2x96xf32>
    %198 = vector.extract_strided_slice %196 {offsets = [0, 0], sizes = [2, 32], strides = [1, 1]} : vector<2x96xf32> to vector<2x32xf32>
    %199 = vector.extract_strided_slice %197 {offsets = [0, 0], sizes = [2, 32], strides = [1, 1]} : vector<2x96xf32> to vector<2x32xf32>
    %200 = arith.addf %198, %199 : vector<2x32xf32>
    %201 = arith.negf %200 : vector<2x32xf32>
    %202 = math.exp %201 : vector<2x32xf32>
    %cst_57 = arith.constant 1.000000e+00 : f32
    %203 = vector.broadcast %cst_57 : f32 to vector<2x32xf32>
    %204 = arith.addf %203, %202 : vector<2x32xf32>
    %205 = arith.divf %203, %204 : vector<2x32xf32>
    %206 = vector.extract_strided_slice %196 {offsets = [0, 32], sizes = [2, 32], strides = [1, 1]} : vector<2x96xf32> to vector<2x32xf32>
    %207 = vector.extract_strided_slice %197 {offsets = [0, 32], sizes = [2, 32], strides = [1, 1]} : vector<2x96xf32> to vector<2x32xf32>
    %208 = arith.addf %206, %207 : vector<2x32xf32>
    %209 = arith.negf %208 : vector<2x32xf32>
    %210 = math.exp %209 : vector<2x32xf32>
    %cst_58 = arith.constant 1.000000e+00 : f32
    %211 = vector.broadcast %cst_58 : f32 to vector<2x32xf32>
    %212 = arith.addf %211, %210 : vector<2x32xf32>
    %213 = arith.divf %211, %212 : vector<2x32xf32>
    %214 = vector.extract_strided_slice %196 {offsets = [0, 64], sizes = [2, 32], strides = [1, 1]} : vector<2x96xf32> to vector<2x32xf32>
    %215 = vector.extract_strided_slice %197 {offsets = [0, 64], sizes = [2, 32], strides = [1, 1]} : vector<2x96xf32> to vector<2x32xf32>
    %216 = vector.broadcast %8 : vector<1x32xf32> to vector<2x32xf32>
    %217 = arith.addf %215, %216 : vector<2x32xf32>
    %218 = arith.mulf %205, %217 : vector<2x32xf32>
    %219 = arith.addf %214, %218 : vector<2x32xf32>
    %220 = math.tanh %219 : vector<2x32xf32>
    %cst_59 = arith.constant 1.000000e+00 : f32
    %221 = vector.broadcast %cst_59 : f32 to vector<2x32xf32>
    %222 = arith.subf %221, %213 : vector<2x32xf32>
    %223 = arith.mulf %222, %220 : vector<2x32xf32>
    %224 = arith.mulf %213, %194 : vector<2x32xf32>
    %225 = arith.addf %223, %224 : vector<2x32xf32>
    %c12_60 = arith.constant 12 : index
    %c0_61 = arith.constant 0 : index
    %226 = vector.load %arg12[%c12_60, %c0_61] : memref<16x32xf32, #tpu.memory_space<vmem>>, vector<2x32xf32>
    tpu.vector_store %arg12[%c12_60, %c0_61], %225 {strides = array<i32>} : memref<16x32xf32, #tpu.memory_space<vmem>>, vector<2x32xf32>,
    %c14 = arith.constant 14 : index
    %c0_62 = arith.constant 0 : index
    %227 = vector.load %arg11[%c14, %c0_62] : memref<16x96xf32, #tpu.memory_space<vmem>>, vector<2x96xf32>
    %cst_63 = arith.constant dense<0.000000e+00> : vector<2x96xf32>
    %228 = tpu.matmul %225, %7, %cst_63 {dimension_numbers = #tpu.dot_dimension_numbers<[1], [0], [0], [1], [0, 0, 1, 1], [], []>} : vector<2x32xf32>, vector<32x96xf32>, vector<2x96xf32> -> vector<2x96xf32>
    %229 = vector.extract_strided_slice %227 {offsets = [0, 0], sizes = [2, 32], strides = [1, 1]} : vector<2x96xf32> to vector<2x32xf32>
    %230 = vector.extract_strided_slice %228 {offsets = [0, 0], sizes = [2, 32], strides = [1, 1]} : vector<2x96xf32> to vector<2x32xf32>
    %231 = arith.addf %229, %230 : vector<2x32xf32>
    %232 = arith.negf %231 : vector<2x32xf32>
    %233 = math.exp %232 : vector<2x32xf32>
    %cst_64 = arith.constant 1.000000e+00 : f32
    %234 = vector.broadcast %cst_64 : f32 to vector<2x32xf32>
    %235 = arith.addf %234, %233 : vector<2x32xf32>
    %236 = arith.divf %234, %235 : vector<2x32xf32>
    %237 = vector.extract_strided_slice %227 {offsets = [0, 32], sizes = [2, 32], strides = [1, 1]} : vector<2x96xf32> to vector<2x32xf32>
    %238 = vector.extract_strided_slice %228 {offsets = [0, 32], sizes = [2, 32], strides = [1, 1]} : vector<2x96xf32> to vector<2x32xf32>
    %239 = arith.addf %237, %238 : vector<2x32xf32>
    %240 = arith.negf %239 : vector<2x32xf32>
    %241 = math.exp %240 : vector<2x32xf32>
    %cst_65 = arith.constant 1.000000e+00 : f32
    %242 = vector.broadcast %cst_65 : f32 to vector<2x32xf32>
    %243 = arith.addf %242, %241 : vector<2x32xf32>
    %244 = arith.divf %242, %243 : vector<2x32xf32>
    %245 = vector.extract_strided_slice %227 {offsets = [0, 64], sizes = [2, 32], strides = [1, 1]} : vector<2x96xf32> to vector<2x32xf32>
    %246 = vector.extract_strided_slice %228 {offsets = [0, 64], sizes = [2, 32], strides = [1, 1]} : vector<2x96xf32> to vector<2x32xf32>
    %247 = vector.broadcast %8 : vector<1x32xf32> to vector<2x32xf32>
    %248 = arith.addf %246, %247 : vector<2x32xf32>
    %249 = arith.mulf %236, %248 : vector<2x32xf32>
    %250 = arith.addf %245, %249 : vector<2x32xf32>
    %251 = math.tanh %250 : vector<2x32xf32>
    %cst_66 = arith.constant 1.000000e+00 : f32
    %252 = vector.broadcast %cst_66 : f32 to vector<2x32xf32>
    %253 = arith.subf %252, %244 : vector<2x32xf32>
    %254 = arith.mulf %253, %251 : vector<2x32xf32>
    %255 = arith.mulf %244, %225 : vector<2x32xf32>
    %256 = arith.addf %254, %255 : vector<2x32xf32>
    %c14_67 = arith.constant 14 : index
    %c0_68 = arith.constant 0 : index
    %257 = vector.load %arg12[%c14_67, %c0_68] : memref<16x32xf32, #tpu.memory_space<vmem>>, vector<2x32xf32>
    tpu.vector_store %arg12[%c14_67, %c0_68], %256 {strides = array<i32>} : memref<16x32xf32, #tpu.memory_space<vmem>>, vector<2x32xf32>,
    %c0_69 = arith.constant 0 : index
    %c0_70 = arith.constant 0 : index
    %258 = vector.load %arg12[%c0_69, %c0_70] : memref<16x32xf32, #tpu.memory_space<vmem>>, vector<16x32xf32>
    %c0_71 = arith.constant 0 : index
    %c0_72 = arith.constant 0 : index
    %259 = vector.load %arg6[%c0_71, %c0_72] : memref<32x32xf32, #tpu.memory_space<vmem>>, vector<32x32xf32>
    %cst_73 = arith.constant dense<0.000000e+00> : vector<16x32xf32>
    %260 = tpu.matmul %258, %259, %cst_73 {dimension_numbers = #tpu.dot_dimension_numbers<[1], [0], [0], [1], [0, 0, 1, 1], [], []>} : vector<16x32xf32>, vector<32x32xf32>, vector<16x32xf32> -> vector<16x32xf32>
    %c0_74 = arith.constant 0 : index
    %c0_75 = arith.constant 0 : index
    %261 = vector.load %arg7[%c0_74, %c0_75] : memref<1x32xf32, #tpu.memory_space<vmem>>, vector<1x32xf32>
    %262 = vector.broadcast %261 : vector<1x32xf32> to vector<16x32xf32>
    %263 = arith.addf %260, %262 : vector<16x32xf32>
    %cst_76 = arith.constant 0.000000e+00 : f32
    %264 = vector.broadcast %cst_76 : f32 to vector<16x32xf32>
    %265 = arith.maximumf %263, %264 : vector<16x32xf32>
    %c0_77 = arith.constant 0 : index
    %c0_78 = arith.constant 0 : index
    %266 = vector.load %arg8[%c0_77, %c0_78] : memref<32x1xf32, #tpu.memory_space<vmem>>, vector<32x1xf32>
    %cst_79 = arith.constant dense<0.000000e+00> : vector<16x1xf32>
    %267 = tpu.matmul %265, %266, %cst_79 {dimension_numbers = #tpu.dot_dimension_numbers<[1], [0], [0], [1], [0, 0, 1, 1], [], []>} : vector<16x32xf32>, vector<32x1xf32>, vector<16x1xf32> -> vector<16x1xf32>
    %c0_80 = arith.constant 0 : index
    %c0_81 = arith.constant 0 : index
    %268 = vector.load %arg9[%c0_80, %c0_81] : memref<1x1xf32, #tpu.memory_space<vmem>>, vector<1x1xf32>
    %269 = vector.broadcast %268 : vector<1x1xf32> to vector<16x1xf32>
    %270 = arith.addf %267, %269 : vector<16x1xf32>
    %c0_82 = arith.constant 0 : index
    %c0_83 = arith.constant 0 : index
    %271 = vector.load %arg10[%c0_82, %c0_83] : memref<16x1xf32, #tpu.memory_space<vmem>>, vector<16x1xf32>
    tpu.vector_store %arg10[%c0_82, %c0_83], %270 {strides = array<i32>} : memref<16x1xf32, #tpu.memory_space<vmem>>, vector<16x1xf32>,
    return
  }
  func.func @transform_0(%arg0: i32) -> (i32, i32) {
    %c0_i32 = arith.constant 0 : i32
    %c0_i32_0 = arith.constant 0 : i32
    %c0_i32_1 = arith.constant 0 : i32
    return %c0_i32, %c0_i32_0 : i32, i32
  }
  func.func @transform_1(%arg0: i32) -> (i32, i32) {
    %c0_i32 = arith.constant 0 : i32
    %c0_i32_0 = arith.constant 0 : i32
    %c0_i32_1 = arith.constant 0 : i32
    return %c0_i32, %c0_i32_0 : i32, i32
  }
  func.func @transform_2(%arg0: i32) -> (i32, i32) {
    %c0_i32 = arith.constant 0 : i32
    %c0_i32_0 = arith.constant 0 : i32
    %c0_i32_1 = arith.constant 0 : i32
    return %c0_i32, %c0_i32_0 : i32, i32
  }
  func.func @transform_3(%arg0: i32) -> (i32, i32) {
    %c0_i32 = arith.constant 0 : i32
    %c0_i32_0 = arith.constant 0 : i32
    %c0_i32_1 = arith.constant 0 : i32
    return %c0_i32, %c0_i32_0 : i32, i32
  }
  func.func @transform_4(%arg0: i32) -> (i32, i32) {
    %c0_i32 = arith.constant 0 : i32
    %c0_i32_0 = arith.constant 0 : i32
    %c0_i32_1 = arith.constant 0 : i32
    return %c0_i32, %c0_i32_0 : i32, i32
  }
  func.func @transform_5(%arg0: i32) -> (i32, i32) {
    %c0_i32 = arith.constant 0 : i32
    %c0_i32_0 = arith.constant 0 : i32
    %c0_i32_1 = arith.constant 0 : i32
    return %c0_i32, %c0_i32_0 : i32, i32
  }
  func.func @transform_6(%arg0: i32) -> (i32, i32) {
    %c0_i32 = arith.constant 0 : i32
    %c0_i32_0 = arith.constant 0 : i32
    %c0_i32_1 = arith.constant 0 : i32
    return %c0_i32, %c0_i32_0 : i32, i32
  }
  func.func @transform_7(%arg0: i32) -> (i32, i32) {
    %c0_i32 = arith.constant 0 : i32
    %c0_i32_0 = arith.constant 0 : i32
    %c0_i32_1 = arith.constant 0 : i32
    return %c0_i32, %c0_i32_0 : i32, i32
  }
  func.func @transform_8(%arg0: i32) -> (i32, i32) {
    %c0_i32 = arith.constant 0 : i32
    %c0_i32_0 = arith.constant 0 : i32
    %c0_i32_1 = arith.constant 0 : i32
    return %c0_i32, %c0_i32_0 : i32, i32
  }
  func.func @transform_9(%arg0: i32) -> (i32, i32) {
    %c0_i32 = arith.constant 0 : i32
    %c0_i32_0 = arith.constant 0 : i32
    %c0_i32_1 = arith.constant 0 : i32
    return %c0_i32, %c0_i32_0 : i32, i32
  }
}

</mosaic_0001>

<llo_original>
// kernel: momentum_model_forward.1
$region0: #{momentum_model_forward.1}
  #allocation0 [shape = 'u32[]', space=smem, size = 0x4, offset = 0x4, fixed_abs, tag = 'smem constant byte address 0x4 - core index']
  #allocation1 [shape = 'u32[144,128]{1,0:T(1,128)}', space=vmem, size = 0x12000, scoped, tag = 'internal scratch']
  #allocation2 [shape = 'f32[16,96]{1,0:T(8,128)}', space=vmem, size = 0x2000, scoped, tag = 'scratch operand']
  #allocation3 [shape = 'f32[16,32]{1,0:T(8,128)}', space=vmem, size = 0x2000, scoped, tag = 'scratch operand']
  #allocation4 [shape = 'f32[1,1]{1,0:T(1,128)S(1)}', space=vmem, size = 0x200, scoped, tag = 'scoped memory for momentum_model_forward.1']
  %s0 = inlined_call_operand.vmem [shape: f32[16,8], index: 0, kind: input, shape index: {}]
  %s1 = inlined_call_operand.hbm [shape: f32[8,96], index: 1, kind: input, shape index: {}]
  %s2 = inlined_call_operand.vmem [shape: f32[1,96], index: 2, kind: input, shape index: {}]
  %s3 = inlined_call_operand.vmem [shape: f32[32,96], index: 3, kind: input, shape index: {}]
  %s4 = inlined_call_operand.vmem [shape: f32[1,32], index: 4, kind: input, shape index: {}]
  %s5 = inlined_call_operand.hbm [shape: f32[32,32], index: 5, kind: input, shape index: {}]
  %s6 = inlined_call_operand.vmem [shape: f32[1,32], index: 6, kind: input, shape index: {}]
  %s7 = inlined_call_operand.vmem [shape: f32[32,1], index: 7, kind: input, shape index: {}]
  %s8 = inlined_call_operand.<no memory space> [shape: f32[1,1], index: 8, kind: input, shape index: {}]
  %s9 = inlined_call_operand.vmem [shape: f32[16,1], index: 9, kind: output, shape index: {}]
  %s10 = sld [smem:[#allocation0]]
  $region54: #{momentum_model_forward.1} parent=0
    _
  %s12 = ssub.s32 1, %s10
  %s13 = scalar_select 0, %s12, %s10
  %v14 = vstv %s8
  %15 = vst [vmem:[#allocation4] sm:$0x1] %v14
  $region1: #{momentum_model_forward.1} parent=0
    #allocation5 [shape = 'u8[4096]{0}', space=vmem, size = 0x1000, scoped, tag = 'input window, operand 1, single buffered']
    #allocation6 [shape = 's32[1]{0}', space=sflag, size = 0x4, scoped, tag = 'scoped memory for momentum_model_forward.1']
    #allocation7 [shape = 'u8[16384]{0}', space=vmem, size = 0x4000, scoped, tag = 'input window, operand 5, single buffered']
    #allocation8 [shape = 's32[1]{0}', space=sflag, size = 0x4, scoped, tag = 'scoped memory for momentum_model_forward.1']
    %16 = vsyncpa [#allocation6], 0
    %17 = vsyncpa [#allocation8], 0
    // Predicated region
    $region2: #{momentum_model_forward.1} parent=1 // pred_check
      _
    $region3: #{momentum_model_forward.1} parent=1 // pred_check_branch
      %19 = sbr.rel (0) target = $region5
    $region4: #{momentum_model_forward.1} parent=1 // pred_region
      _
    $region5: #{momentum_model_forward.1} parent=1 // pred_fallthru
      _
    // Predicated region
    $region6: #{momentum_model_forward.1} parent=1 // pred_check
      _
    $region7: #{momentum_model_forward.1} parent=1 // pred_check_branch
      %21 = sbr.rel (0) target = $region9
    $region8: #{momentum_model_forward.1} parent=1 // pred_region
      %s23 = ssub.s32 128, 128
      %24 = vsyncadd [#allocation6], %s23
      %s26 = sshll.u32 [#allocation5], 4
      %s27 = int_to_ptr.vmem [resolvable:$true] %s26
      %29 = dma.hbm_to_vmem [thread:$0]  %s1, 128, %s27, [#allocation6]
    $region9: #{momentum_model_forward.1} parent=1 // pred_fallthru
      _
    // Predicated region
    $region10: #{momentum_model_forward.1} parent=1 // pred_check
      _
    $region11: #{momentum_model_forward.1} parent=1 // pred_check_branch
      %31 = sbr.rel (0) target = $region13
    $region12: #{momentum_model_forward.1} parent=1 // pred_region
      _
    $region13: #{momentum_model_forward.1} parent=1 // pred_fallthru
      _
    // Predicated region
    $region14: #{momentum_model_forward.1} parent=1 // pred_check
      _
    $region15: #{momentum_model_forward.1} parent=1 // pred_check_branch
      %33 = sbr.rel (0) target = $region17
    $region16: #{momentum_model_forward.1} parent=1 // pred_region
      _
    $region17: #{momentum_model_forward.1} parent=1 // pred_fallthru
      _
    // Predicated region
    $region18: #{momentum_model_forward.1} parent=1 // pred_check
      _
    $region19: #{momentum_model_forward.1} parent=1 // pred_check_branch
      %35 = sbr.rel (0) target = $region21
    $region20: #{momentum_model_forward.1} parent=1 // pred_region
      _
    $region21: #{momentum_model_forward.1} parent=1 // pred_fallthru
      _
    // Predicated region
    $region22: #{momentum_model_forward.1} parent=1 // pred_check
      _
    $region23: #{momentum_model_forward.1} parent=1 // pred_check_branch
      %37 = sbr.rel (0) target = $region25
    $region24: #{momentum_model_forward.1} parent=1 // pred_region
      %s39 = ssub.s32 512, 512
      %40 = vsyncadd [#allocation8], %s39
      %s41 = sshll.u32 [#allocation7], 4
      %s42 = int_to_ptr.vmem [resolvable:$true] %s41
      %47 = dma.hbm_to_vmem [thread:$0]  %s5, 512, %s42, [#allocation8], 128, 128, 8
    $region25: #{momentum_model_forward.1} parent=1 // pred_fallthru
      _
    // Predicated region
    $region26: #{momentum_model_forward.1} parent=1 // pred_check
      _
    $region27: #{momentum_model_forward.1} parent=1 // pred_check_branch
      %49 = sbr.rel (0) target = $region29
    $region28: #{momentum_model_forward.1} parent=1 // pred_region
      _
    $region29: #{momentum_model_forward.1} parent=1 // pred_fallthru
      _
    // Predicated region
    $region30: #{momentum_model_forward.1} parent=1 // pred_check
      _
    $region31: #{momentum_model_forward.1} parent=1 // pred_check_branch
      %51 = sbr.rel (0) target = $region33
    $region32: #{momentum_model_forward.1} parent=1 // pred_region
      _
    $region33: #{momentum_model_forward.1} parent=1 // pred_fallthru
      _
    // Predicated region
    $region34: #{momentum_model_forward.1} parent=1 // pred_check
      _
    $region35: #{momentum_model_forward.1} parent=1 // pred_check_branch
      %53 = sbr.rel (0) target = $region37
    $region36: #{momentum_model_forward.1} parent=1 // pred_region
      _
    $region37: #{momentum_model_forward.1} parent=1 // pred_fallthru
      _
    // Predicated region
    $region38: #{momentum_model_forward.1} parent=1 // pred_check
      _
    $region39: #{momentum_model_forward.1} parent=1 // pred_check_branch
      %55 = sbr.rel (0) target = $region41
    $region40: #{momentum_model_forward.1} parent=1 // pred_region
      %56 = dma.done [#allocation6], 128
    $region41: #{momentum_model_forward.1} parent=1 // pred_fallthru
      _
    // Predicated region
    $region42: #{momentum_model_forward.1} parent=1 // pred_check
      _
    $region43: #{momentum_model_forward.1} parent=1 // pred_check_branch
      %58 = sbr.rel (0) target = $region45
    $region44: #{momentum_model_forward.1} parent=1 // pred_region
      %59 = dma.done [#allocation8], 512
    $region45: #{momentum_model_forward.1} parent=1 // pred_fallthru
      _
    %v60 = vld [vmem:[%s0] sm:$0xff]
    %v61 = vld [vmem:[%s0 + $0x8] sm:$0xff]
    %v62 = vld [vmem:[#allocation5] sm:$0xff]
    %v63 = vld [vmem:[%s2] sm:$0x1]
    %v65 = vlaneseq
    %v66 = vshrl.u32 %v65, 7
    %v67 = vsub.s32 0, %v66
    %v68 = vrot.slane %v63, %v67
    %vm70 = vcmask 64512
    %v72 = vsel %vm70, %v60, 0
    %v75 = vsel %vm70, %v61, 0
    %77 = vmatprep.subr.mxu0 0.0
    %78 = vmatpush1.msra.mxu0 %v62
    %79 = vmatprep.subr.mxu0 0.0
    %80 = vmatpush1.msra.mxu0 0.0
    %81 = vmatprep.subr.mxu0 0.0
    %82 = vmatpush1.msra.mxu0 0.0
    %83 = vmatprep.subr.mxu0 0.0
    %84 = vmatpush1.msra.mxu0 0.0
    %85 = vmatprep.subr.mxu0 0.0
    %86 = vmatpush1.msra.mxu0 0.0
    %87 = vmatprep.subr.mxu0 0.0
    %88 = vmatpush1.msra.mxu0 0.0
    %89 = vmatprep.subr.mxu0 0.0
    %90 = vmatpush1.msra.mxu0 0.0
    %91 = vmatprep.subr.mxu0 0.0
    %92 = vmatpush1.msra.mxu0 0.0
    %93 = vmatprep.subr.mxu0 0.0
    %94 = vmatpush1.msra.mxu0 0.0
    %95 = vmatprep.subr.mxu0 0.0
    %96 = vmatpush1.msra.mxu0 0.0
    %97 = vmatprep.subr.mxu0 0.0
    %98 = vmatpush1.msra.mxu0 0.0
    %99 = vmatprep.subr.mxu0 0.0
    %100 = vmatpush1.msra.mxu0 0.0
    %101 = vmatprep.subr.mxu0 0.0
    %102 = vmatpush1.msra.mxu0 0.0
    %103 = vmatprep.subr.mxu0 0.0
    %104 = vmatpush1.msra.mxu0 0.0
    %105 = vmatprep.subr.mxu0 0.0
    %106 = vmatpush1.msra.mxu0 0.0
    %107 = vmatprep.subr.mxu0 0.0
    %108 = vmatpush1.msra.mxu0 0.0
    %109 = vmatprep.subr.mxu0 0.0
    %110 = vmatpush1.msra.mxu0 0.0
    %111 = vmatprep.subr.mxu0 0.0
    %112 = vmatpush1.msra.mxu0 0.0
    %113 = vmatprep.subr.mxu0 0.0
    %114 = vmatpush1.msra.mxu0 0.0
    %115 = vmatprep.subr.mxu0 0.0
    %116 = vmatpush1.msra.mxu0 0.0
    %117 = vmatprep.subr.mxu0 0.0
    %118 = vmatpush1.msra.mxu0 0.0
    %119 = vmatprep.subr.mxu0 0.0
    %120 = vmatpush1.msra.mxu0 0.0
    %121 = vmatprep.subr.mxu0 0.0
    %122 = vmatpush1.msra.mxu0 0.0
    %123 = vmatprep.subr.mxu0 0.0
    %124 = vmatpush1.msra.mxu0 0.0
    %125 = vmatprep.subr.mxu0 0.0
    %126 = vmatpush1.msra.mxu0 0.0
    %127 = vmatprep.subr.mxu0 0.0
    %128 = vmatpush1.msra.mxu0 0.0
    %129 = vmatprep.subr.mxu0 0.0
    %130 = vmatpush1.msra.mxu0 0.0
    %131 = vmatprep.subr.mxu0 0.0
    %132 = vmatpush1.msra.mxu0 0.0
    %133 = vmatprep.subr.mxu0 0.0
    %134 = vmatpush1.msra.mxu0 0.0
    %135 = vmatprep.subr.mxu0 0.0
    %136 = vmatpush1.msra.mxu0 0.0
    %137 = vmatprep.subr.mxu0 0.0
    %138 = vmatpush1.msra.mxu0 0.0
    %139 = vmatprep.subr.mxu0 0.0
    %140 = vmatpush1.msra.mxu0 0.0
    %141 = vmatprep.mubr.f32.mxu0 0.0
    %142 = vmatmul.mubr.f32.gmra.mrb[0].mxu0 %v72
    %v143 = vpop.f32.mrb[0].mxu0
    %v144 = vadd.f32 %v68, %v143
    %v145 = vpop.f32.mrb[0].mxu0
    %146 = vmatprep.mubr.f32.mxu0 0.0
    %147 = vmatmul.mubr.f32.gmra.mrb[0].mxu0 %v75
    %v148 = vpop.f32.mrb[0].mxu0
    %v149 = vadd.f32 %v68, %v148
    %v150 = vpop.f32.mrb[0].mxu0
    %151 = vdwg.mxu0
    %vm152 = vcmask 785408
    %153 = vst.msk [vmem:[#allocation2] sm:$0xff] %vm152, %v144
    %154 = vst.msk [vmem:[#allocation2 + $0x8] sm:$0xff] %vm152, %v149
    %v155 = vld [vmem:[%s3] sm:$0xff]
    %v156 = vld [vmem:[%s3 + $0x8] sm:$0xff]
    %v157 = vld [vmem:[%s3 + $0x10] sm:$0xff]
    %v158 = vld [vmem:[%s3 + $0x18] sm:$0xff]
    %v159 = vld [vmem:[%s4] sm:$0x1]
    %v160 = vld [vmem:[#allocation2] sm:$0x3]
    %vm161 = vcmask 261120
    %v163 = vsel %vm161, 0.0, 0
    %165 = vmatprep.subr.mxu0 0.0
    %166 = vmatpush1.msra.mxu0 %v155
    %167 = vmatprep.subr.mxu0 0.0
    %168 = vmatpush1.msra.mxu0 %v156
    %169 = vmatprep.subr.mxu0 0.0
    %170 = vmatpush1.msra.mxu0 %v157
    %171 = vmatprep.subr.mxu0 0.0
    %172 = vmatpush1.msra.mxu0 %v158
    %173 = vmatprep.subr.mxu0 0.0
    %174 = vmatpush1.msra.mxu0 0.0
    %175 = vmatprep.subr.mxu0 0.0
    %176 = vmatpush1.msra.mxu0 0.0
    %177 = vmatprep.subr.mxu0 0.0
    %178 = vmatpush1.msra.mxu0 0.0
    %179 = vmatprep.subr.mxu0 0.0
    %180 = vmatpush1.msra.mxu0 0.0
    %181 = vmatprep.subr.mxu0 0.0
    %182 = vmatpush1.msra.mxu0 0.0
    %183 = vmatprep.subr.mxu0 0.0
    %184 = vmatpush1.msra.mxu0 0.0
    %185 = vmatprep.subr.mxu0 0.0
    %186 = vmatpush1.msra.mxu0 0.0
    %187 = vmatprep.subr.mxu0 0.0
    %188 = vmatpush1.msra.mxu0 0.0
    %189 = vmatprep.subr.mxu0 0.0
    %190 = vmatpush1.msra.mxu0 0.0
    %191 = vmatprep.subr.mxu0 0.0
    %192 = vmatpush1.msra.mxu0 0.0
    %193 = vmatprep.subr.mxu0 0.0
    %194 = vmatpush1.msra.mxu0 0.0
    %195 = vmatprep.subr.mxu0 0.0
    %196 = vmatpush1.msra.mxu0 0.0
    %197 = vmatprep.subr.mxu0 0.0
    %198 = vmatpush1.msra.mxu0 0.0
    %199 = vmatprep.subr.mxu0 0.0
    %200 = vmatpush1.msra.mxu0 0.0
    %201 = vmatprep.subr.mxu0 0.0
    %202 = vmatpush1.msra.mxu0 0.0
    %203 = vmatprep.subr.mxu0 0.0
    %204 = vmatpush1.msra.mxu0 0.0
    %205 = vmatprep.subr.mxu0 0.0
    %206 = vmatpush1.msra.mxu0 0.0
    %207 = vmatprep.subr.mxu0 0.0
    %208 = vmatpush1.msra.mxu0 0.0
    %209 = vmatprep.subr.mxu0 0.0
    %210 = vmatpush1.msra.mxu0 0.0
    %211 = vmatprep.subr.mxu0 0.0
    %212 = vmatpush1.msra.mxu0 0.0
    %213 = vmatprep.subr.mxu0 0.0
    %214 = vmatpush1.msra.mxu0 0.0
    %215 = vmatprep.subr.mxu0 0.0
    %216 = vmatpush1.msra.mxu0 0.0
    %217 = vmatprep.subr.mxu0 0.0
    %218 = vmatpush1.msra.mxu0 0.0
    %219 = vmatprep.subr.mxu0 0.0
    %220 = vmatpush1.msra.mxu0 0.0
    %221 = vmatprep.subr.mxu0 0.0
    %222 = vmatpush1.msra.mxu0 0.0
    %223 = vmatprep.subr.mxu0 0.0
    %224 = vmatpush1.msra.mxu0 0.0
    %225 = vmatprep.subr.mxu0 0.0
    %226 = vmatpush1.msra.mxu0 0.0
    %227 = vmatprep.subr.mxu0 0.0
    %228 = vmatpush1.msra.mxu0 0.0
    %229 = vmatprep.mubr.f32.mxu0 0.0
    %230 = vmatmul.mubr.f32.gmra.mrb[0].mxu0 %v163
    %v231 = vpop.f32.mrb[0].mxu0
    %v232 = vadd.f32 0.0, %v231
    %v233 = vpop.f32.mrb[0].mxu0
    %234 = vdwg.mxu0
    %v235 = vadd.f32 %v160, %v232
    %v236 = vxor.u32 %v235, 2147483648
    %v237 = vmul.f32 %v236, 1.442695
    %v238 = vpow.pop %v237
    %v239 = vadd.f32 %v238, 1.0
    %v240 = vrcp.pop %v239
    %v241 = vmul.f32 1.0, %v240
    %v243 = vlaneseq
    %v244 = vshrl.u32 %v243, 7
    %v245 = vsub.s32 0, %v244
    %v246 = vrot.slane %v159, %v245
    %247 = vrot.lane.b32.xlu0 %v246, 64
    %v248 = vpop.permute.xlu0 %247
    %v250 = vadd.f32 %v232, %v248
    %252 = vrot.lane.b32.xlu0 %v250, 64
    %v253 = vpop.permute.xlu0 %252
    %v255 = vmul.f32 %v241, %v253
    %257 = vrot.lane.b32.xlu0 %v255, 64
    %v258 = vpop.permute.xlu0 %257
    %v260 = vadd.f32 %v160, %v258
    %v261 = vtanh.pop %v260
    %v262 = vsub.f32 1.0, %v241
    %264 = vrot.lane.b32.xlu0 %v261, 96
    %v265 = vpop.permute.xlu0 %264
    %v267 = vmul.f32 %v262, %v265
    %v268 = vmul.f32 %v241, 0.0
    %v269 = vadd.f32 %v267, %v268
    %271 = vrot.lane.b32.xlu0 %v269, 96
    %v272 = vpop.permute.xlu0 %271
    %vm274 = vcmask 254976
    %275 = vst.msk [vmem:[#allocation3] sm:$0x3] %vm274, %v272
    %v276 = vld [vmem:[#allocation2 + $0x2] sm:$0x3]
    %v277 = vsel %vm161, %v272, 0
    %279 = vmatprep.subr.mxu0 0.0
    %280 = vmatpush1.msra.mxu0 %v155
    %281 = vmatprep.subr.mxu0 0.0
    %282 = vmatpush1.msra.mxu0 %v156
    %283 = vmatprep.subr.mxu0 0.0
    %284 = vmatpush1.msra.mxu0 %v157
    %285 = vmatprep.subr.mxu0 0.0
    %286 = vmatpush1.msra.mxu0 %v158
    %287 = vmatprep.subr.mxu0 0.0
    %288 = vmatpush1.msra.mxu0 0.0
    %289 = vmatprep.subr.mxu0 0.0
    %290 = vmatpush1.msra.mxu0 0.0
    %291 = vmatprep.subr.mxu0 0.0
    %292 = vmatpush1.msra.mxu0 0.0
    %293 = vmatprep.subr.mxu0 0.0
    %294 = vmatpush1.msra.mxu0 0.0
    %295 = vmatprep.subr.mxu0 0.0
    %296 = vmatpush1.msra.mxu0 0.0
    %297 = vmatprep.subr.mxu0 0.0
    %298 = vmatpush1.msra.mxu0 0.0
    %299 = vmatprep.subr.mxu0 0.0
    %300 = vmatpush1.msra.mxu0 0.0
    %301 = vmatprep.subr.mxu0 0.0
    %302 = vmatpush1.msra.mxu0 0.0
    %303 = vmatprep.subr.mxu0 0.0
    %304 = vmatpush1.msra.mxu0 0.0
    %305 = vmatprep.subr.mxu0 0.0
    %306 = vmatpush1.msra.mxu0 0.0
    %307 = vmatprep.subr.mxu0 0.0
    %308 = vmatpush1.msra.mxu0 0.0
    %309 = vmatprep.subr.mxu0 0.0
    %310 = vmatpush1.msra.mxu0 0.0
    %311 = vmatprep.subr.mxu0 0.0
    %312 = vmatpush1.msra.mxu0 0.0
    %313 = vmatprep.subr.mxu0 0.0
    %314 = vmatpush1.msra.mxu0 0.0
    %315 = vmatprep.subr.mxu0 0.0
    %316 = vmatpush1.msra.mxu0 0.0
    %317 = vmatprep.subr.mxu0 0.0
    %318 = vmatpush1.msra.mxu0 0.0
    %319 = vmatprep.subr.mxu0 0.0
    %320 = vmatpush1.msra.mxu0 0.0
    %321 = vmatprep.subr.mxu0 0.0
    %322 = vmatpush1.msra.mxu0 0.0
    %323 = vmatprep.subr.mxu0 0.0
    %324 = vmatpush1.msra.mxu0 0.0
    %325 = vmatprep.subr.mxu0 0.0
    %326 = vmatpush1.msra.mxu0 0.0
    %327 = vmatprep.subr.mxu0 0.0
    %328 = vmatpush1.msra.mxu0 0.0
    %329 = vmatprep.subr.mxu0 0.0
    %330 = vmatpush1.msra.mxu0 0.0
    %331 = vmatprep.subr.mxu0 0.0
    %332 = vmatpush1.msra.mxu0 0.0
    %333 = vmatprep.subr.mxu0 0.0
    %334 = vmatpush1.msra.mxu0 0.0
    %335 = vmatprep.subr.mxu0 0.0
    %336 = vmatpush1.msra.mxu0 0.0
    %337 = vmatprep.subr.mxu0 0.0
    %338 = vmatpush1.msra.mxu0 0.0
    %339 = vmatprep.subr.mxu0 0.0
    %340 = vmatpush1.msra.mxu0 0.0
    %341 = vmatprep.subr.mxu0 0.0
    %342 = vmatpush1.msra.mxu0 0.0
    %343 = vmatprep.mubr.f32.mxu0 0.0
    %344 = vmatmul.mubr.f32.gmra.mrb[0].mxu0 %v277
    %v345 = vpop.f32.mrb[0].mxu0
    %v346 = vadd.f32 0.0, %v345
    %v347 = vpop.f32.mrb[0].mxu0
    %348 = vdwg.mxu0
    %v349 = vadd.f32 %v276, %v346
    %v350 = vxor.u32 %v349, 2147483648
    %v351 = vmul.f32 %v350, 1.442695
    %v352 = vpow.pop %v351
    %v353 = vadd.f32 %v352, 1.0
    %v354 = vrcp.pop %v353
    %v355 = vmul.f32 1.0, %v354
    %v356 = vadd.f32 %v346, %v248
    %358 = vrot.lane.b32.xlu0 %v356, 64
    %v359 = vpop.permute.xlu0 %358
    %v361 = vmul.f32 %v355, %v359
    %363 = vrot.lane.b32.xlu0 %v361, 64
    %v364 = vpop.permute.xlu0 %363
    %v366 = vadd.f32 %v276, %v364
    %v367 = vtanh.pop %v366
    %v368 = vsub.f32 1.0, %v355
    %370 = vrot.lane.b32.xlu0 %v367, 96
    %v371 = vpop.permute.xlu0 %370
    %v373 = vmul.f32 %v368, %v371
    %v374 = vmul.f32 %v355, %v269
    %v375 = vadd.f32 %v373, %v374
    %377 = vrot.lane.b32.xlu0 %v375, 96
    %v378 = vpop.permute.xlu0 %377
    %380 = vst.msk [vmem:[#allocation3 + $0x2] sm:$0x3] %vm274, %v378
    %v381 = vld [vmem:[#allocation2 + $0x4] sm:$0x3]
    %v382 = vsel %vm161, %v378, 0
    %384 = vmatprep.subr.mxu0 0.0
    %385 = vmatpush1.msra.mxu0 %v155
    %386 = vmatprep.subr.mxu0 0.0
    %387 = vmatpush1.msra.mxu0 %v156
    %388 = vmatprep.subr.mxu0 0.0
    %389 = vmatpush1.msra.mxu0 %v157
    %390 = vmatprep.subr.mxu0 0.0
    %391 = vmatpush1.msra.mxu0 %v158
    %392 = vmatprep.subr.mxu0 0.0
    %393 = vmatpush1.msra.mxu0 0.0
    %394 = vmatprep.subr.mxu0 0.0
    %395 = vmatpush1.msra.mxu0 0.0
    %396 = vmatprep.subr.mxu0 0.0
    %397 = vmatpush1.msra.mxu0 0.0
    %398 = vmatprep.subr.mxu0 0.0
    %399 = vmatpush1.msra.mxu0 0.0
    %400 = vmatprep.subr.mxu0 0.0
    %401 = vmatpush1.msra.mxu0 0.0
    %402 = vmatprep.subr.mxu0 0.0
    %403 = vmatpush1.msra.mxu0 0.0
    %404 = vmatprep.subr.mxu0 0.0
    %405 = vmatpush1.msra.mxu0 0.0
    %406 = vmatprep.subr.mxu0 0.0
    %407 = vmatpush1.msra.mxu0 0.0
    %408 = vmatprep.subr.mxu0 0.0
    %409 = vmatpush1.msra.mxu0 0.0
    %410 = vmatprep.subr.mxu0 0.0
    %411 = vmatpush1.msra.mxu0 0.0
    %412 = vmatprep.subr.mxu0 0.0
    %413 = vmatpush1.msra.mxu0 0.0
    %414 = vmatprep.subr.mxu0 0.0
    %415 = vmatpush1.msra.mxu0 0.0
    %416 = vmatprep.subr.mxu0 0.0
    %417 = vmatpush1.msra.mxu0 0.0
    %418 = vmatprep.subr.mxu0 0.0
    %419 = vmatpush1.msra.mxu0 0.0
    %420 = vmatprep.subr.mxu0 0.0
    %421 = vmatpush1.msra.mxu0 0.0
    %422 = vmatprep.subr.mxu0 0.0
    %423 = vmatpush1.msra.mxu0 0.0
    %424 = vmatprep.subr.mxu0 0.0
    %425 = vmatpush1.msra.mxu0 0.0
    %426 = vmatprep.subr.mxu0 0.0
    %427 = vmatpush1.msra.mxu0 0.0
    %428 = vmatprep.subr.mxu0 0.0
    %429 = vmatpush1.msra.mxu0 0.0
    %430 = vmatprep.subr.mxu0 0.0
    %431 = vmatpush1.msra.mxu0 0.0
    %432 = vmatprep.subr.mxu0 0.0
    %433 = vmatpush1.msra.mxu0 0.0
    %434 = vmatprep.subr.mxu0 0.0
    %435 = vmatpush1.msra.mxu0 0.0
    %436 = vmatprep.subr.mxu0 0.0
    %437 = vmatpush1.msra.mxu0 0.0
    %438 = vmatprep.subr.mxu0 0.0
    %439 = vmatpush1.msra.mxu0 0.0
    %440 = vmatprep.subr.mxu0 0.0
    %441 = vmatpush1.msra.mxu0 0.0
    %442 = vmatprep.subr.mxu0 0.0
    %443 = vmatpush1.msra.mxu0 0.0
    %444 = vmatprep.subr.mxu0 0.0
    %445 = vmatpush1.msra.mxu0 0.0
    %446 = vmatprep.subr.mxu0 0.0
    %447 = vmatpush1.msra.mxu0 0.0
    %448 = vmatprep.mubr.f32.mxu0 0.0
    %449 = vmatmul.mubr.f32.gmra.mrb[0].mxu0 %v382
    %v450 = vpop.f32.mrb[0].mxu0
    %v451 = vadd.f32 0.0, %v450
    %v452 = vpop.f32.mrb[0].mxu0
    %453 = vdwg.mxu0
    %v454 = vadd.f32 %v381, %v451
    %v455 = vxor.u32 %v454, 2147483648
    %v456 = vmul.f32 %v455, 1.442695
    %v457 = vpow.pop %v456
    %v458 = vadd.f32 %v457, 1.0
    %v459 = vrcp.pop %v458
    %v460 = vmul.f32 1.0, %v459
    %v461 = vadd.f32 %v451, %v248
    %463 = vrot.lane.b32.xlu0 %v461, 64
    %v464 = vpop.permute.xlu0 %463
    %v466 = vmul.f32 %v460, %v464
    %468 = vrot.lane.b32.xlu0 %v466, 64
    %v469 = vpop.permute.xlu0 %468
    %v471 = vadd.f32 %v381, %v469
    %v472 = vtanh.pop %v471
    %v473 = vsub.f32 1.0, %v460
    %475 = vrot.lane.b32.xlu0 %v472, 96
    %v476 = vpop.permute.xlu0 %475
    %v478 = vmul.f32 %v473, %v476
    %v479 = vmul.f32 %v460, %v375
    %v480 = vadd.f32 %v478, %v479
    %482 = vrot.lane.b32.xlu0 %v480, 96
    %v483 = vpop.permute.xlu0 %482
    %485 = vst.msk [vmem:[#allocation3 + $0x4] sm:$0x3] %vm274, %v483
    %v486 = vld [vmem:[#allocation2 + $0x6] sm:$0x3]
    %v487 = vsel %vm161, %v483, 0
    %489 = vmatprep.subr.mxu0 0.0
    %490 = vmatpush1.msra.mxu0 %v155
    %491 = vmatprep.subr.mxu0 0.0
    %492 = vmatpush1.msra.mxu0 %v156
    %493 = vmatprep.subr.mxu0 0.0
    %494 = vmatpush1.msra.mxu0 %v157
    %495 = vmatprep.subr.mxu0 0.0
    %496 = vmatpush1.msra.mxu0 %v158
    %497 = vmatprep.subr.mxu0 0.0
    %498 = vmatpush1.msra.mxu0 0.0
    %499 = vmatprep.subr.mxu0 0.0
    %500 = vmatpush1.msra.mxu0 0.0
    %501 = vmatprep.subr.mxu0 0.0
    %502 = vmatpush1.msra.mxu0 0.0
    %503 = vmatprep.subr.mxu0 0.0
    %504 = vmatpush1.msra.mxu0 0.0
    %505 = vmatprep.subr.mxu0 0.0
    %506 = vmatpush1.msra.mxu0 0.0
    %507 = vmatprep.subr.mxu0 0.0
    %508 = vmatpush1.msra.mxu0 0.0
    %509 = vmatprep.subr.mxu0 0.0
    %510 = vmatpush1.msra.mxu0 0.0
    %511 = vmatprep.subr.mxu0 0.0
    %512 = vmatpush1.msra.mxu0 0.0
    %513 = vmatprep.subr.mxu0 0.0
    %514 = vmatpush1.msra.mxu0 0.0
    %515 = vmatprep.subr.mxu0 0.0
    %516 = vmatpush1.msra.mxu0 0.0
    %517 = vmatprep.subr.mxu0 0.0
    %518 = vmatpush1.msra.mxu0 0.0
    %519 = vmatprep.subr.mxu0 0.0
    %520 = vmatpush1.msra.mxu0 0.0
    %521 = vmatprep.subr.mxu0 0.0
    %522 = vmatpush1.msra.mxu0 0.0
    %523 = vmatprep.subr.mxu0 0.0
    %524 = vmatpush1.msra.mxu0 0.0
    %525 = vmatprep.subr.mxu0 0.0
    %526 = vmatpush1.msra.mxu0 0.0
    %527 = vmatprep.subr.mxu0 0.0
    %528 = vmatpush1.msra.mxu0 0.0
    %529 = vmatprep.subr.mxu0 0.0
    %530 = vmatpush1.msra.mxu0 0.0
    %531 = vmatprep.subr.mxu0 0.0
    %532 = vmatpush1.msra.mxu0 0.0
    %533 = vmatprep.subr.mxu0 0.0
    %534 = vmatpush1.msra.mxu0 0.0
    %535 = vmatprep.subr.mxu0 0.0
    %536 = vmatpush1.msra.mxu0 0.0
    %537 = vmatprep.subr.mxu0 0.0
    %538 = vmatpush1.msra.mxu0 0.0
    %539 = vmatprep.subr.mxu0 0.0
    %540 = vmatpush1.msra.mxu0 0.0
    %541 = vmatprep.subr.mxu0 0.0
    %542 = vmatpush1.msra.mxu0 0.0
    %543 = vmatprep.subr.mxu0 0.0
    %544 = vmatpush1.msra.mxu0 0.0
    %545 = vmatprep.subr.mxu0 0.0
    %546 = vmatpush1.msra.mxu0 0.0
    %547 = vmatprep.subr.mxu0 0.0
    %548 = vmatpush1.msra.mxu0 0.0
    %549 = vmatprep.subr.mxu0 0.0
    %550 = vmatpush1.msra.mxu0 0.0
    %551 = vmatprep.subr.mxu0 0.0
    %552 = vmatpush1.msra.mxu0 0.0
    %553 = vmatprep.mubr.f32.mxu0 0.0
    %554 = vmatmul.mubr.f32.gmra.mrb[0].mxu0 %v487
    %v555 = vpop.f32.mrb[0].mxu0
    %v556 = vadd.f32 0.0, %v555
    %v557 = vpop.f32.mrb[0].mxu0
    %558 = vdwg.mxu0
    %v559 = vadd.f32 %v486, %v556
    %v560 = vxor.u32 %v559, 2147483648
    %v561 = vmul.f32 %v560, 1.442695
    %v562 = vpow.pop %v561
    %v563 = vadd.f32 %v562, 1.0
    %v564 = vrcp.pop %v563
    %v565 = vmul.f32 1.0, %v564
    %v566 = vadd.f32 %v556, %v248
    %568 = vrot.lane.b32.xlu0 %v566, 64
    %v569 = vpop.permute.xlu0 %568
    %v571 = vmul.f32 %v565, %v569
    %573 = vrot.lane.b32.xlu0 %v571, 64
    %v574 = vpop.permute.xlu0 %573
    %v576 = vadd.f32 %v486, %v574
    %v577 = vtanh.pop %v576
    %v578 = vsub.f32 1.0, %v565
    %580 = vrot.lane.b32.xlu0 %v577, 96
    %v581 = vpop.permute.xlu0 %580
    %v583 = vmul.f32 %v578, %v581
    %v584 = vmul.f32 %v565, %v480
    %v585 = vadd.f32 %v583, %v584
    %587 = vrot.lane.b32.xlu0 %v585, 96
    %v588 = vpop.permute.xlu0 %587
    %590 = vst.msk [vmem:[#allocation3 + $0x6] sm:$0x3] %vm274, %v588
    %v591 = vld [vmem:[#allocation2 + $0x8] sm:$0x3]
    %v592 = vsel %vm161, %v588, 0
    %594 = vmatprep.subr.mxu0 0.0
    %595 = vmatpush1.msra.mxu0 %v155
    %596 = vmatprep.subr.mxu0 0.0
    %597 = vmatpush1.msra.mxu0 %v156
    %598 = vmatprep.subr.mxu0 0.0
    %599 = vmatpush1.msra.mxu0 %v157
    %600 = vmatprep.subr.mxu0 0.0
    %601 = vmatpush1.msra.mxu0 %v158
    %602 = vmatprep.subr.mxu0 0.0
    %603 = vmatpush1.msra.mxu0 0.0
    %604 = vmatprep.subr.mxu0 0.0
    %605 = vmatpush1.msra.mxu0 0.0
    %606 = vmatprep.subr.mxu0 0.0
    %607 = vmatpush1.msra.mxu0 0.0
    %608 = vmatprep.subr.mxu0 0.0
    %609 = vmatpush1.msra.mxu0 0.0
    %610 = vmatprep.subr.mxu0 0.0
    %611 = vmatpush1.msra.mxu0 0.0
    %612 = vmatprep.subr.mxu0 0.0
    %613 = vmatpush1.msra.mxu0 0.0
    %614 = vmatprep.subr.mxu0 0.0
    %615 = vmatpush1.msra.mxu0 0.0
    %616 = vmatprep.subr.mxu0 0.0
    %617 = vmatpush1.msra.mxu0 0.0
    %618 = vmatprep.subr.mxu0 0.0
    %619 = vmatpush1.msra.mxu0 0.0
    %620 = vmatprep.subr.mxu0 0.0
    %621 = vmatpush1.msra.mxu0 0.0
    %622 = vmatprep.subr.mxu0 0.0
    %623 = vmatpush1.msra.mxu0 0.0
    %624 = vmatprep.subr.mxu0 0.0
    %625 = vmatpush1.msra.mxu0 0.0
    %626 = vmatprep.subr.mxu0 0.0
    %627 = vmatpush1.msra.mxu0 0.0
    %628 = vmatprep.subr.mxu0 0.0
    %629 = vmatpush1.msra.mxu0 0.0
    %630 = vmatprep.subr.mxu0 0.0
    %631 = vmatpush1.msra.mxu0 0.0
    %632 = vmatprep.subr.mxu0 0.0
    %633 = vmatpush1.msra.mxu0 0.0
    %634 = vmatprep.subr.mxu0 0.0
    %635 = vmatpush1.msra.mxu0 0.0
    %636 = vmatprep.subr.mxu0 0.0
    %637 = vmatpush1.msra.mxu0 0.0
    %638 = vmatprep.subr.mxu0 0.0
    %639 = vmatpush1.msra.mxu0 0.0
    %640 = vmatprep.subr.mxu0 0.0
    %641 = vmatpush1.msra.mxu0 0.0
    %642 = vmatprep.subr.mxu0 0.0
    %643 = vmatpush1.msra.mxu0 0.0
    %644 = vmatprep.subr.mxu0 0.0
    %645 = vmatpush1.msra.mxu0 0.0
    %646 = vmatprep.subr.mxu0 0.0
    %647 = vmatpush1.msra.mxu0 0.0
    %648 = vmatprep.subr.mxu0 0.0
    %649 = vmatpush1.msra.mxu0 0.0
    %650 = vmatprep.subr.mxu0 0.0
    %651 = vmatpush1.msra.mxu0 0.0
    %652 = vmatprep.subr.mxu0 0.0
    %653 = vmatpush1.msra.mxu0 0.0
    %654 = vmatprep.subr.mxu0 0.0
    %655 = vmatpush1.msra.mxu0 0.0
    %656 = vmatprep.subr.mxu0 0.0
    %657 = vmatpush1.msra.mxu0 0.0
    %658 = vmatprep.mubr.f32.mxu0 0.0
    %659 = vmatmul.mubr.f32.gmra.mrb[0].mxu0 %v592
    %v660 = vpop.f32.mrb[0].mxu0
    %v661 = vadd.f32 0.0, %v660
    %v662 = vpop.f32.mrb[0].mxu0
    %663 = vdwg.mxu0
    %v664 = vadd.f32 %v591, %v661
    %v665 = vxor.u32 %v664, 2147483648
    %v666 = vmul.f32 %v665, 1.442695
    %v667 = vpow.pop %v666
    %v668 = vadd.f32 %v667, 1.0
    %v669 = vrcp.pop %v668
    %v670 = vmul.f32 1.0, %v669
    %v671 = vadd.f32 %v661, %v248
    %673 = vrot.lane.b32.xlu0 %v671, 64
    %v674 = vpop.permute.xlu0 %673
    %v676 = vmul.f32 %v670, %v674
    %678 = vrot.lane.b32.xlu0 %v676, 64
    %v679 = vpop.permute.xlu0 %678
    %v681 = vadd.f32 %v591, %v679
    %v682 = vtanh.pop %v681
    %v683 = vsub.f32 1.0, %v670
    %685 = vrot.lane.b32.xlu0 %v682, 96
    %v686 = vpop.permute.xlu0 %685
    %v688 = vmul.f32 %v683, %v686
    %v689 = vmul.f32 %v670, %v585
    %v690 = vadd.f32 %v688, %v689
    %692 = vrot.lane.b32.xlu0 %v690, 96
    %v693 = vpop.permute.xlu0 %692
    %695 = vst.msk [vmem:[#allocation3 + $0x8] sm:$0x3] %vm274, %v693
    %v696 = vld [vmem:[#allocation2 + $0xa] sm:$0x3]
    %v697 = vsel %vm161, %v693, 0
    %699 = vmatprep.subr.mxu0 0.0
    %700 = vmatpush1.msra.mxu0 %v155
    %701 = vmatprep.subr.mxu0 0.0
    %702 = vmatpush1.msra.mxu0 %v156
    %703 = vmatprep.subr.mxu0 0.0
    %704 = vmatpush1.msra.mxu0 %v157
    %705 = vmatprep.subr.mxu0 0.0
    %706 = vmatpush1.msra.mxu0 %v158
    %707 = vmatprep.subr.mxu0 0.0
    %708 = vmatpush1.msra.mxu0 0.0
    %709 = vmatprep.subr.mxu0 0.0
    %710 = vmatpush1.msra.mxu0 0.0
    %711 = vmatprep.subr.mxu0 0.0
    %712 = vmatpush1.msra.mxu0 0.0
    %713 = vmatprep.subr.mxu0 0.0
    %714 = vmatpush1.msra.mxu0 0.0
    %715 = vmatprep.subr.mxu0 0.0
    %716 = vmatpush1.msra.mxu0 0.0
    %717 = vmatprep.subr.mxu0 0.0
    %718 = vmatpush1.msra.mxu0 0.0
    %719 = vmatprep.subr.mxu0 0.0
    %720 = vmatpush1.msra.mxu0 0.0
    %721 = vmatprep.subr.mxu0 0.0
    %722 = vmatpush1.msra.mxu0 0.0
    %723 = vmatprep.subr.mxu0 0.0
    %724 = vmatpush1.msra.mxu0 0.0
    %725 = vmatprep.subr.mxu0 0.0
    %726 = vmatpush1.msra.mxu0 0.0
    %727 = vmatprep.subr.mxu0 0.0
    %728 = vmatpush1.msra.mxu0 0.0
    %729 = vmatprep.subr.mxu0 0.0
    %730 = vmatpush1.msra.mxu0 0.0
    %731 = vmatprep.subr.mxu0 0.0
    %732 = vmatpush1.msra.mxu0 0.0
    %733 = vmatprep.subr.mxu0 0.0
    %734 = vmatpush1.msra.mxu0 0.0
    %735 = vmatprep.subr.mxu0 0.0
    %736 = vmatpush1.msra.mxu0 0.0
    %737 = vmatprep.subr.mxu0 0.0
    %738 = vmatpush1.msra.mxu0 0.0
    %739 = vmatprep.subr.mxu0 0.0
    %740 = vmatpush1.msra.mxu0 0.0
    %741 = vmatprep.subr.mxu0 0.0
    %742 = vmatpush1.msra.mxu0 0.0
    %743 = vmatprep.subr.mxu0 0.0
    %744 = vmatpush1.msra.mxu0 0.0
    %745 = vmatprep.subr.mxu0 0.0
    %746 = vmatpush1.msra.mxu0 0.0
    %747 = vmatprep.subr.mxu0 0.0
    %748 = vmatpush1.msra.mxu0 0.0
    %749 = vmatprep.subr.mxu0 0.0
    %750 = vmatpush1.msra.mxu0 0.0
    %751 = vmatprep.subr.mxu0 0.0
    %752 = vmatpush1.msra.mxu0 0.0
    %753 = vmatprep.subr.mxu0 0.0
    %754 = vmatpush1.msra.mxu0 0.0
    %755 = vmatprep.subr.mxu0 0.0
    %756 = vmatpush1.msra.mxu0 0.0
    %757 = vmatprep.subr.mxu0 0.0
    %758 = vmatpush1.msra.mxu0 0.0
    %759 = vmatprep.subr.mxu0 0.0
    %760 = vmatpush1.msra.mxu0 0.0
    %761 = vmatprep.subr.mxu0 0.0
    %762 = vmatpush1.msra.mxu0 0.0
    %763 = vmatprep.mubr.f32.mxu0 0.0
    %764 = vmatmul.mubr.f32.gmra.mrb[0].mxu0 %v697
    %v765 = vpop.f32.mrb[0].mxu0
    %v766 = vadd.f32 0.0, %v765
    %v767 = vpop.f32.mrb[0].mxu0
    %768 = vdwg.mxu0
    %v769 = vadd.f32 %v696, %v766
    %v770 = vxor.u32 %v769, 2147483648
    %v771 = vmul.f32 %v770, 1.442695
    %v772 = vpow.pop %v771
    %v773 = vadd.f32 %v772, 1.0
    %v774 = vrcp.pop %v773
    %v775 = vmul.f32 1.0, %v774
    %v776 = vadd.f32 %v766, %v248
    %778 = vrot.lane.b32.xlu0 %v776, 64
    %v779 = vpop.permute.xlu0 %778
    %v781 = vmul.f32 %v775, %v779
    %783 = vrot.lane.b32.xlu0 %v781, 64
    %v784 = vpop.permute.xlu0 %783
    %v786 = vadd.f32 %v696, %v784
    %v787 = vtanh.pop %v786
    %v788 = vsub.f32 1.0, %v775
    %790 = vrot.lane.b32.xlu0 %v787, 96
    %v791 = vpop.permute.xlu0 %790
    %v793 = vmul.f32 %v788, %v791
    %v794 = vmul.f32 %v775, %v690
    %v795 = vadd.f32 %v793, %v794
    %797 = vrot.lane.b32.xlu0 %v795, 96
    %v798 = vpop.permute.xlu0 %797
    %800 = vst.msk [vmem:[#allocation3 + $0xa] sm:$0x3] %vm274, %v798
    %v801 = vld [vmem:[#allocation2 + $0xc] sm:$0x3]
    %v802 = vsel %vm161, %v798, 0
    %804 = vmatprep.subr.mxu0 0.0
    %805 = vmatpush1.msra.mxu0 %v155
    %806 = vmatprep.subr.mxu0 0.0
    %807 = vmatpush1.msra.mxu0 %v156
    %808 = vmatprep.subr.mxu0 0.0
    %809 = vmatpush1.msra.mxu0 %v157
    %810 = vmatprep.subr.mxu0 0.0
    %811 = vmatpush1.msra.mxu0 %v158
    %812 = vmatprep.subr.mxu0 0.0
    %813 = vmatpush1.msra.mxu0 0.0
    %814 = vmatprep.subr.mxu0 0.0
    %815 = vmatpush1.msra.mxu0 0.0
    %816 = vmatprep.subr.mxu0 0.0
    %817 = vmatpush1.msra.mxu0 0.0
    %818 = vmatprep.subr.mxu0 0.0
    %819 = vmatpush1.msra.mxu0 0.0
    %820 = vmatprep.subr.mxu0 0.0
    %821 = vmatpush1.msra.mxu0 0.0
    %822 = vmatprep.subr.mxu0 0.0
    %823 = vmatpush1.msra.mxu0 0.0
    %824 = vmatprep.subr.mxu0 0.0
    %825 = vmatpush1.msra.mxu0 0.0
    %826 = vmatprep.subr.mxu0 0.0
    %827 = vmatpush1.msra.mxu0 0.0
    %828 = vmatprep.subr.mxu0 0.0
    %829 = vmatpush1.msra.mxu0 0.0
    %830 = vmatprep.subr.mxu0 0.0
    %831 = vmatpush1.msra.mxu0 0.0
    %832 = vmatprep.subr.mxu0 0.0
    %833 = vmatpush1.msra.mxu0 0.0
    %834 = vmatprep.subr.mxu0 0.0
    %835 = vmatpush1.msra.mxu0 0.0
    %836 = vmatprep.subr.mxu0 0.0
    %837 = vmatpush1.msra.mxu0 0.0
    %838 = vmatprep.subr.mxu0 0.0
    %839 = vmatpush1.msra.mxu0 0.0
    %840 = vmatprep.subr.mxu0 0.0
    %841 = vmatpush1.msra.mxu0 0.0
    %842 = vmatprep.subr.mxu0 0.0
    %843 = vmatpush1.msra.mxu0 0.0
    %844 = vmatprep.subr.mxu0 0.0
    %845 = vmatpush1.msra.mxu0 0.0
    %846 = vmatprep.subr.mxu0 0.0
    %847 = vmatpush1.msra.mxu0 0.0
    %848 = vmatprep.subr.mxu0 0.0
    %849 = vmatpush1.msra.mxu0 0.0
    %850 = vmatprep.subr.mxu0 0.0
    %851 = vmatpush1.msra.mxu0 0.0
    %852 = vmatprep.subr.mxu0 0.0
    %853 = vmatpush1.msra.mxu0 0.0
    %854 = vmatprep.subr.mxu0 0.0
    %855 = vmatpush1.msra.mxu0 0.0
    %856 = vmatprep.subr.mxu0 0.0
    %857 = vmatpush1.msra.mxu0 0.0
    %858 = vmatprep.subr.mxu0 0.0
    %859 = vmatpush1.msra.mxu0 0.0
    %860 = vmatprep.subr.mxu0 0.0
    %861 = vmatpush1.msra.mxu0 0.0
    %862 = vmatprep.subr.mxu0 0.0
    %863 = vmatpush1.msra.mxu0 0.0
    %864 = vmatprep.subr.mxu0 0.0
    %865 = vmatpush1.msra.mxu0 0.0
    %866 = vmatprep.subr.mxu0 0.0
    %867 = vmatpush1.msra.mxu0 0.0
    %868 = vmatprep.mubr.f32.mxu0 0.0
    %869 = vmatmul.mubr.f32.gmra.mrb[0].mxu0 %v802
    %v870 = vpop.f32.mrb[0].mxu0
    %v871 = vadd.f32 0.0, %v870
    %v872 = vpop.f32.mrb[0].mxu0
    %873 = vdwg.mxu0
    %v874 = vadd.f32 %v801, %v871
    %v875 = vxor.u32 %v874, 2147483648
    %v876 = vmul.f32 %v875, 1.442695
    %v877 = vpow.pop %v876
    %v878 = vadd.f32 %v877, 1.0
    %v879 = vrcp.pop %v878
    %v880 = vmul.f32 1.0, %v879
    %v881 = vadd.f32 %v871, %v248
    %883 = vrot.lane.b32.xlu0 %v881, 64
    %v884 = vpop.permute.xlu0 %883
    %v886 = vmul.f32 %v880, %v884
    %888 = vrot.lane.b32.xlu0 %v886, 64
    %v889 = vpop.permute.xlu0 %888
    %v891 = vadd.f32 %v801, %v889
    %v892 = vtanh.pop %v891
    %v893 = vsub.f32 1.0, %v880
    %895 = vrot.lane.b32.xlu0 %v892, 96
    %v896 = vpop.permute.xlu0 %895
    %v898 = vmul.f32 %v893, %v896
    %v899 = vmul.f32 %v880, %v795
    %v900 = vadd.f32 %v898, %v899
    %902 = vrot.lane.b32.xlu0 %v900, 96
    %v903 = vpop.permute.xlu0 %902
    %905 = vst.msk [vmem:[#allocation3 + $0xc] sm:$0x3] %vm274, %v903
    %v906 = vld [vmem:[#allocation2 + $0xe] sm:$0x3]
    %v907 = vsel %vm161, %v903, 0
    %909 = vmatprep.subr.mxu0 0.0
    %910 = vmatpush1.msra.mxu0 %v155
    %911 = vmatprep.subr.mxu0 0.0
    %912 = vmatpush1.msra.mxu0 %v156
    %913 = vmatprep.subr.mxu0 0.0
    %914 = vmatpush1.msra.mxu0 %v157
    %915 = vmatprep.subr.mxu0 0.0
    %916 = vmatpush1.msra.mxu0 %v158
    %917 = vmatprep.subr.mxu0 0.0
    %918 = vmatpush1.msra.mxu0 0.0
    %919 = vmatprep.subr.mxu0 0.0
    %920 = vmatpush1.msra.mxu0 0.0
    %921 = vmatprep.subr.mxu0 0.0
    %922 = vmatpush1.msra.mxu0 0.0
    %923 = vmatprep.subr.mxu0 0.0
    %924 = vmatpush1.msra.mxu0 0.0
    %925 = vmatprep.subr.mxu0 0.0
    %926 = vmatpush1.msra.mxu0 0.0
    %927 = vmatprep.subr.mxu0 0.0
    %928 = vmatpush1.msra.mxu0 0.0
    %929 = vmatprep.subr.mxu0 0.0
    %930 = vmatpush1.msra.mxu0 0.0
    %931 = vmatprep.subr.mxu0 0.0
    %932 = vmatpush1.msra.mxu0 0.0
    %933 = vmatprep.subr.mxu0 0.0
    %934 = vmatpush1.msra.mxu0 0.0
    %935 = vmatprep.subr.mxu0 0.0
    %936 = vmatpush1.msra.mxu0 0.0
    %937 = vmatprep.subr.mxu0 0.0
    %938 = vmatpush1.msra.mxu0 0.0
    %939 = vmatprep.subr.mxu0 0.0
    %940 = vmatpush1.msra.mxu0 0.0
    %941 = vmatprep.subr.mxu0 0.0
    %942 = vmatpush1.msra.mxu0 0.0
    %943 = vmatprep.subr.mxu0 0.0
    %944 = vmatpush1.msra.mxu0 0.0
    %945 = vmatprep.subr.mxu0 0.0
    %946 = vmatpush1.msra.mxu0 0.0
    %947 = vmatprep.subr.mxu0 0.0
    %948 = vmatpush1.msra.mxu0 0.0
    %949 = vmatprep.subr.mxu0 0.0
    %950 = vmatpush1.msra.mxu0 0.0
    %951 = vmatprep.subr.mxu0 0.0
    %952 = vmatpush1.msra.mxu0 0.0
    %953 = vmatprep.subr.mxu0 0.0
    %954 = vmatpush1.msra.mxu0 0.0
    %955 = vmatprep.subr.mxu0 0.0
    %956 = vmatpush1.msra.mxu0 0.0
    %957 = vmatprep.subr.mxu0 0.0
    %958 = vmatpush1.msra.mxu0 0.0
    %959 = vmatprep.subr.mxu0 0.0
    %960 = vmatpush1.msra.mxu0 0.0
    %961 = vmatprep.subr.mxu0 0.0
    %962 = vmatpush1.msra.mxu0 0.0
    %963 = vmatprep.subr.mxu0 0.0
    %964 = vmatpush1.msra.mxu0 0.0
    %965 = vmatprep.subr.mxu0 0.0
    %966 = vmatpush1.msra.mxu0 0.0
    %967 = vmatprep.subr.mxu0 0.0
    %968 = vmatpush1.msra.mxu0 0.0
    %969 = vmatprep.subr.mxu0 0.0
    %970 = vmatpush1.msra.mxu0 0.0
    %971 = vmatprep.subr.mxu0 0.0
    %972 = vmatpush1.msra.mxu0 0.0
    %973 = vmatprep.mubr.f32.mxu0 0.0
    %974 = vmatmul.mubr.f32.gmra.mrb[0].mxu0 %v907
    %v975 = vpop.f32.mrb[0].mxu0
    %v976 = vadd.f32 0.0, %v975
    %v977 = vpop.f32.mrb[0].mxu0
    %978 = vdwg.mxu0
    %v979 = vadd.f32 %v906, %v976
    %v980 = vxor.u32 %v979, 2147483648
    %v981 = vmul.f32 %v980, 1.442695
    %v982 = vpow.pop %v981
    %v983 = vadd.f32 %v982, 1.0
    %v984 = vrcp.pop %v983
    %v985 = vmul.f32 1.0, %v984
    %v986 = vadd.f32 %v976, %v248
    %988 = vrot.lane.b32.xlu0 %v986, 64
    %v989 = vpop.permute.xlu0 %988
    %v991 = vmul.f32 %v985, %v989
    %993 = vrot.lane.b32.xlu0 %v991, 64
    %v994 = vpop.permute.xlu0 %993
    %v996 = vadd.f32 %v906, %v994
    %v997 = vtanh.pop %v996
    %v998 = vsub.f32 1.0, %v985
    %1000 = vrot.lane.b32.xlu0 %v997, 96
    %v1001 = vpop.permute.xlu0 %1000
    %v1003 = vmul.f32 %v998, %v1001
    %v1004 = vmul.f32 %v985, %v900
    %v1005 = vadd.f32 %v1003, %v1004
    %1007 = vrot.lane.b32.xlu0 %v1005, 96
    %v1008 = vpop.permute.xlu0 %1007
    %1010 = vst.msk [vmem:[#allocation3 + $0xe] sm:$0x3] %vm274, %v1008
    %v1011 = vld [vmem:[#allocation3] sm:$0xff]
    %v1012 = vld [vmem:[#allocation3 + $0x8] sm:$0xff]
    %v1013 = vld [vmem:[#allocation7] sm:$0xff]
    %v1014 = vld [vmem:[#allocation7 + $0x8] sm:$0xff]
    %v1015 = vld [vmem:[#allocation7 + $0x10] sm:$0xff]
    %v1016 = vld [vmem:[#allocation7 + $0x18] sm:$0xff]
    %v1017 = vld [vmem:[%s6] sm:$0x1]
    %v1019 = vlaneseq
    %v1020 = vshrl.u32 %v1019, 7
    %v1021 = vsub.s32 0, %v1020
    %v1022 = vrot.slane %v1017, %v1021
    %v1025 = vsel %vm161, %v1011, 0
    %v1028 = vsel %vm161, %v1012, 0
    %1030 = vmatprep.subr.mxu0 0.0
    %1031 = vmatpush1.msra.mxu0 %v1013
    %1032 = vmatprep.subr.mxu0 0.0
    %1033 = vmatpush1.msra.mxu0 %v1014
    %1034 = vmatprep.subr.mxu0 0.0
    %1035 = vmatpush1.msra.mxu0 %v1015
    %1036 = vmatprep.subr.mxu0 0.0
    %1037 = vmatpush1.msra.mxu0 %v1016
    %1038 = vmatprep.subr.mxu0 0.0
    %1039 = vmatpush1.msra.mxu0 0.0
    %1040 = vmatprep.subr.mxu0 0.0
    %1041 = vmatpush1.msra.mxu0 0.0
    %1042 = vmatprep.subr.mxu0 0.0
    %1043 = vmatpush1.msra.mxu0 0.0
    %1044 = vmatprep.subr.mxu0 0.0
    %1045 = vmatpush1.msra.mxu0 0.0
    %1046 = vmatprep.subr.mxu0 0.0
    %1047 = vmatpush1.msra.mxu0 0.0
    %1048 = vmatprep.subr.mxu0 0.0
    %1049 = vmatpush1.msra.mxu0 0.0
    %1050 = vmatprep.subr.mxu0 0.0
    %1051 = vmatpush1.msra.mxu0 0.0
    %1052 = vmatprep.subr.mxu0 0.0
    %1053 = vmatpush1.msra.mxu0 0.0
    %1054 = vmatprep.subr.mxu0 0.0
    %1055 = vmatpush1.msra.mxu0 0.0
    %1056 = vmatprep.subr.mxu0 0.0
    %1057 = vmatpush1.msra.mxu0 0.0
    %1058 = vmatprep.subr.mxu0 0.0
    %1059 = vmatpush1.msra.mxu0 0.0
    %1060 = vmatprep.subr.mxu0 0.0
    %1061 = vmatpush1.msra.mxu0 0.0
    %1062 = vmatprep.subr.mxu0 0.0
    %1063 = vmatpush1.msra.mxu0 0.0
    %1064 = vmatprep.subr.mxu0 0.0
    %1065 = vmatpush1.msra.mxu0 0.0
    %1066 = vmatprep.subr.mxu0 0.0
    %1067 = vmatpush1.msra.mxu0 0.0
    %1068 = vmatprep.subr.mxu0 0.0
    %1069 = vmatpush1.msra.mxu0 0.0
    %1070 = vmatprep.subr.mxu0 0.0
    %1071 = vmatpush1.msra.mxu0 0.0
    %1072 = vmatprep.subr.mxu0 0.0
    %1073 = vmatpush1.msra.mxu0 0.0
    %1074 = vmatprep.subr.mxu0 0.0
    %1075 = vmatpush1.msra.mxu0 0.0
    %1076 = vmatprep.subr.mxu0 0.0
    %1077 = vmatpush1.msra.mxu0 0.0
    %1078 = vmatprep.subr.mxu0 0.0
    %1079 = vmatpush1.msra.mxu0 0.0
    %1080 = vmatprep.subr.mxu0 0.0
    %1081 = vmatpush1.msra.mxu0 0.0
    %1082 = vmatprep.subr.mxu0 0.0
    %1083 = vmatpush1.msra.mxu0 0.0
    %1084 = vmatprep.subr.mxu0 0.0
    %1085 = vmatpush1.msra.mxu0 0.0
    %1086 = vmatprep.subr.mxu0 0.0
    %1087 = vmatpush1.msra.mxu0 0.0
    %1088 = vmatprep.subr.mxu0 0.0
    %1089 = vmatpush1.msra.mxu0 0.0
    %1090 = vmatprep.subr.mxu0 0.0
    %1091 = vmatpush1.msra.mxu0 0.0
    %1092 = vmatprep.subr.mxu0 0.0
    %1093 = vmatpush1.msra.mxu0 0.0
    %1094 = vmatprep.mubr.f32.mxu0 0.0
    %1095 = vmatmul.mubr.f32.gmra.mrb[0].mxu0 %v1025
    %v1096 = vpop.f32.mrb[0].mxu0
    %v1097 = vadd.f32 %v1022, %v1096
    %v1098 = vpop.f32.mrb[0].mxu0
    %1099 = vmatprep.mubr.f32.mxu0 0.0
    %1100 = vmatmul.mubr.f32.gmra.mrb[0].mxu0 %v1028
    %v1101 = vpop.f32.mrb[0].mxu0
    %v1102 = vadd.f32 %v1022, %v1101
    %v1103 = vpop.f32.mrb[0].mxu0
    %1104 = vdwg.mxu0
    %v1105 = vmax.f32 %v1097, 0.0
    %v1106 = vmax.f32 %v1102, 0.0
    %v1107 = vld [vmem:[%s7] sm:$0xff]
    %v1108 = vld [vmem:[%s7 + $0x8] sm:$0xff]
    %v1109 = vld [vmem:[%s7 + $0x10] sm:$0xff]
    %v1110 = vld [vmem:[%s7 + $0x18] sm:$0xff]
    %v1111 = vld [vmem:[#allocation4] sm:$0x1]
    %v1113 = vlaneseq
    %v1114 = vshrl.u32 %v1113, 7
    %v1115 = vsub.s32 0, %v1114
    %v1116 = vrot.slane %v1111, %v1115
    %v1119 = vsel %vm161, %v1105, 0
    %v1122 = vsel %vm161, %v1106, 0
    %1124 = vmatprep.subr.mxu0 0.0
    %1125 = vmatpush1.msra.mxu0 %v1107
    %1126 = vmatprep.subr.mxu0 0.0
    %1127 = vmatpush1.msra.mxu0 %v1108
    %1128 = vmatprep.subr.mxu0 0.0
    %1129 = vmatpush1.msra.mxu0 %v1109
    %1130 = vmatprep.subr.mxu0 0.0
    %1131 = vmatpush1.msra.mxu0 %v1110
    %1132 = vmatprep.subr.mxu0 0.0
    %1133 = vmatpush1.msra.mxu0 0.0
    %1134 = vmatprep.subr.mxu0 0.0
    %1135 = vmatpush1.msra.mxu0 0.0
    %1136 = vmatprep.subr.mxu0 0.0
    %1137 = vmatpush1.msra.mxu0 0.0
    %1138 = vmatprep.subr.mxu0 0.0
    %1139 = vmatpush1.msra.mxu0 0.0
    %1140 = vmatprep.subr.mxu0 0.0
    %1141 = vmatpush1.msra.mxu0 0.0
    %1142 = vmatprep.subr.mxu0 0.0
    %1143 = vmatpush1.msra.mxu0 0.0
    %1144 = vmatprep.subr.mxu0 0.0
    %1145 = vmatpush1.msra.mxu0 0.0
    %1146 = vmatprep.subr.mxu0 0.0
    %1147 = vmatpush1.msra.mxu0 0.0
    %1148 = vmatprep.subr.mxu0 0.0
    %1149 = vmatpush1.msra.mxu0 0.0
    %1150 = vmatprep.subr.mxu0 0.0
    %1151 = vmatpush1.msra.mxu0 0.0
    %1152 = vmatprep.subr.mxu0 0.0
    %1153 = vmatpush1.msra.mxu0 0.0
    %1154 = vmatprep.subr.mxu0 0.0
    %1155 = vmatpush1.msra.mxu0 0.0
    %1156 = vmatprep.subr.mxu0 0.0
    %1157 = vmatpush1.msra.mxu0 0.0
    %1158 = vmatprep.subr.mxu0 0.0
    %1159 = vmatpush1.msra.mxu0 0.0
    %1160 = vmatprep.subr.mxu0 0.0
    %1161 = vmatpush1.msra.mxu0 0.0
    %1162 = vmatprep.subr.mxu0 0.0
    %1163 = vmatpush1.msra.mxu0 0.0
    %1164 = vmatprep.subr.mxu0 0.0
    %1165 = vmatpush1.msra.mxu0 0.0
    %1166 = vmatprep.subr.mxu0 0.0
    %1167 = vmatpush1.msra.mxu0 0.0
    %1168 = vmatprep.subr.mxu0 0.0
    %1169 = vmatpush1.msra.mxu0 0.0
    %1170 = vmatprep.subr.mxu0 0.0
    %1171 = vmatpush1.msra.mxu0 0.0
    %1172 = vmatprep.subr.mxu0 0.0
    %1173 = vmatpush1.msra.mxu0 0.0
    %1174 = vmatprep.subr.mxu0 0.0
    %1175 = vmatpush1.msra.mxu0 0.0
    %1176 = vmatprep.subr.mxu0 0.0
    %1177 = vmatpush1.msra.mxu0 0.0
    %1178 = vmatprep.subr.mxu0 0.0
    %1179 = vmatpush1.msra.mxu0 0.0
    %1180 = vmatprep.subr.mxu0 0.0
    %1181 = vmatpush1.msra.mxu0 0.0
    %1182 = vmatprep.subr.mxu0 0.0
    %1183 = vmatpush1.msra.mxu0 0.0
    %1184 = vmatprep.subr.mxu0 0.0
    %1185 = vmatpush1.msra.mxu0 0.0
    %1186 = vmatprep.subr.mxu0 0.0
    %1187 = vmatpush1.msra.mxu0 0.0
    %1188 = vmatprep.mubr.f32.mxu0 0.0
    %1189 = vmatmul.mubr.f32.gmra.mrb[0].mxu0 %v1119
    %v1190 = vpop.f32.mrb[0].mxu0
    %v1191 = vadd.f32 %v1116, %v1190
    %v1192 = vpop.f32.mrb[0].mxu0
    %1193 = vmatprep.mubr.f32.mxu0 0.0
    %1194 = vmatmul.mubr.f32.gmra.mrb[0].mxu0 %v1122
    %v1195 = vpop.f32.mrb[0].mxu0
    %v1196 = vadd.f32 %v1116, %v1195
    %v1197 = vpop.f32.mrb[0].mxu0
    %1198 = vdwg.mxu0
    %vm1199 = vcmask 7168
    %1200 = vst.msk [vmem:[%s9] sm:$0xff] %vm1199, %v1191
    %1201 = vst.msk [vmem:[%s9 + $0x8] sm:$0xff] %vm1199, %v1196
    // Predicated region
    $region46: #{momentum_model_forward.1} parent=1 // pred_check
      _
    $region47: #{momentum_model_forward.1} parent=1 // pred_check_branch
      %1203 = sbr.rel (0) target = $region49
    $region48: #{momentum_model_forward.1} parent=1 // pred_region
      _
    $region49: #{momentum_model_forward.1} parent=1 // pred_fallthru
      _
    // Predicated region
    $region50: #{momentum_model_forward.1} parent=1 // pred_check
      _
    $region51: #{momentum_model_forward.1} parent=1 // pred_check_branch
      %1205 = sbr.rel (0) target = $region53
    $region52: #{momentum_model_forward.1} parent=1 // pred_region
      _
    $region53: #{momentum_model_forward.1} parent=1 // pred_fallthru
      _
    %1206 = vsyncpa [#allocation6], 1
    %1207 = vsyncpa [#allocation8], 1

</llo_original>
